<compile_context>
chip_gen: v7x
topology: tpu7x:2x2x1
jax: 0.10.0
libtpu: 0.0.40
codegen_flags: <defaults>
</compile_context>

<pallas_src>
import jax
import jax.numpy as jnp
from jax.experimental import pallas as pl
from jax.experimental.pallas import tpu as pltpu

NOISE_DIM = 100
H = 1200
OUT = 784

H_PAD = 1280      # 1200 -> 1280 (multiple of 256)
OUT_PAD = 896     # 784  -> 896  (multiple of 128; intentionally NOT rounded up to 1024)

TILE_N = 128                                       # w2-column / w3-row tile per step
CORE_SPLIT = 2                                     # leading "parallel" axis (2-TC chips)
STEPS_PER_CORE = H_PAD // (TILE_N * CORE_SPLIT)    # 5
assert H_PAD % (TILE_N * CORE_SPLIT) == 0

WEIGHT_DTYPE = jnp.bfloat16


def _generator_kernel(z_ref, w1_ref, b1_ref, w2_ref, b2_ref, w3_ref,
                      part_ref, x1_sc, acc_sc):
    """One (core c, column-tile n) grid step.

    z:    [B, 100]       f32  resident        b1: [1, 1280] f32 resident
    w1:   [100, 1280]    bf16 resident
    w2:   [1280, 128]    bf16 column tile     b2: [1, 128]  f32 tile
    w3:   [128, 896]     bf16 row tile
    part: [B, 896]       f32  per-core partial (leading core axis squeezed)
    x1_sc:[B, 1280] bf16 scratch   acc_sc:[B, 896] f32 scratch
    """
    n = pl.program_id(1)

    @pl.when(n == 0)
    def _():
        # Layer 1: computed once per core, kept VMEM-resident in x1_sc.
        x1 = jnp.dot(z_ref[...].astype(w1_ref.dtype), w1_ref[...],
                     preferred_element_type=jnp.float32)
        x1_sc[...] = jnp.maximum(x1 + b1_ref[...], 0.0).astype(x1_sc.dtype)
        acc_sc[...] = jnp.zeros_like(acc_sc)

    # Layer-2 column tile + layer-3 row tile, accumulated (overlaps next tile's DMA).
    x2 = jnp.dot(x1_sc[...], w2_ref[...], preferred_element_type=jnp.float32)
    x2 = jnp.maximum(x2 + b2_ref[...], 0.0)
    acc_sc[...] += jnp.dot(x2.astype(w3_ref.dtype), w3_ref[...],
                           preferred_element_type=jnp.float32)

    @pl.when(n == pl.num_programs(1) - 1)
    def _():
        part_ref[...] = acc_sc[...]


def init_generator_params(key, dtype=WEIGHT_DTYPE):
    """nn.Linear-style U(-1/sqrt(fan_in)) init.

    Weights are stored [in_features, out_features] (y = x @ W + b), padded ONCE with
    zeros to aligned shapes, and cast to bf16. Biases stay f32, shape [1, N_pad].
    w1 keeps K = 100 unpadded since z arrives as [B, 100].
    """
    dims = [
        (NOISE_DIM, H, NOISE_DIM, H_PAD),
        (H, H, H_PAD, H_PAD),
        (H, OUT, H_PAD, OUT_PAD),
    ]
    params = []
    for fan_in, fan_out, in_pad, out_pad in dims:
        key, kw, kb = jax.random.split(key, 3)
        bound = 1.0 / float(fan_in) ** 0.5
        w = jax.random.uniform(kw, (fan_in, fan_out), jnp.float32, -bound, bound)
        b = jax.random.uniform(kb, (fan_out,), jnp.float32, -bound, bound)
        wp = jnp.zeros((in_pad, out_pad), dtype).at[:fan_in, :fan_out].set(
            w.astype(dtype))
        bp = jnp.zeros((1, out_pad), jnp.float32).at[0, :fan_out].set(b)
        params.append((wp, bp))
    return params


@jax.jit
def generator_forward(z, params):
    (w1, b1), (w2, b2), (w3, b3) = params
    B = z.shape[0]

    def col(c, n):  # column-tile block index handled by (core c, step n)
        return c * STEPS_PER_CORE + n

    partials = pl.pallas_call(
        _generator_kernel,
        out_shape=jax.ShapeDtypeStruct((CORE_SPLIT, B, OUT_PAD), jnp.float32),
        grid=(CORE_SPLIT, STEPS_PER_CORE),
        in_specs=[
            pl.BlockSpec((B, NOISE_DIM), lambda c, n: (0, 0)),             # z  (resident)
            pl.BlockSpec((NOISE_DIM, H_PAD), lambda c, n: (0, 0)),         # w1 (resident)
            pl.BlockSpec((1, H_PAD), lambda c, n: (0, 0)),                 # b1 (resident)
            pl.BlockSpec((H_PAD, TILE_N), lambda c, n: (0, col(c, n))),    # w2 col tile
            pl.BlockSpec((1, TILE_N), lambda c, n: (0, col(c, n))),        # b2 tile
            pl.BlockSpec((TILE_N, OUT_PAD), lambda c, n: (col(c, n), 0)),  # w3 row tile
        ],
        out_specs=pl.BlockSpec((None, B, OUT_PAD), lambda c, n: (c, 0, 0)),
        scratch_shapes=[
            pltpu.VMEM((B, H_PAD), WEIGHT_DTYPE),   # x1 = relu(z@w1+b1), resident
            pltpu.VMEM((B, OUT_PAD), jnp.float32),  # layer-3 partial accumulator
        ],
        compiler_params=pltpu.CompilerParams(
            dimension_semantics=("parallel", "arbitrary"),
            vmem_limit_bytes=32 * 1024 * 1024),
    )(z, w1, b1, w2, b2, w3)

    # Tiny fused XLA epilogue: cross-core partial sum + output bias + tanh + un-pad.
    out = jnp.tanh(jnp.sum(partials, axis=0) + b3)
    return out[:, :OUT]


def _reference_forward(z, params):
    """Pure-JAX f32 reference using the (unpadded views of the) stored weights."""
    (w1, b1), (w2, b2), (w3, b3) = params
    w1f = w1[:NOISE_DIM, :H].astype(jnp.float32)
    w2f = w2[:H, :H].astype(jnp.float32)
    w3f = w3[:H, :OUT].astype(jnp.float32)
    x = jnp.maximum(z @ w1f + b1[0, :H], 0.0)
    x = jnp.maximum(x @ w2f + b2[0, :H], 0.0)
    return jnp.tanh(x @ w3f + b3[0, :OUT])


if __name__ == "__main__":
    key = jax.random.PRNGKey(0)
    kp, kz = jax.random.split(key)

    params = init_generator_params(kp)
    batch = 8
    z = jax.random.normal(kz, (batch, NOISE_DIM), jnp.float32)

    out = jax.block_until_ready(generator_forward(z, params))
    assert out.shape == (batch, OUT), out.shape

    ref = _reference_forward(z, params)
    # bf16 weights / activations with f32 accumulation -> loose but meaningful tol.
    max_err = float(jnp.max(jnp.abs(out - ref)))
    assert jnp.allclose(out, ref, atol=5e-2, rtol=5e-2), max_err

    print("KERNEL_OK")
</pallas_src>

<mosaic_0001>
module attributes {stable_mosaic.version = 11 : i64} {
  func.func @_generator_kernel(%arg0: i32, %arg1: i32, %arg2: memref<8x100xf32, #tpu.memory_space<vmem>>, %arg3: memref<100x1280xbf16, #tpu.memory_space<vmem>>, %arg4: memref<1x1280xf32, #tpu.memory_space<vmem>>, %arg5: memref<1280x128xbf16, #tpu.memory_space<vmem>>, %arg6: memref<1x128xf32, #tpu.memory_space<vmem>>, %arg7: memref<128x896xbf16, #tpu.memory_space<vmem>>, %arg8: memref<1x8x896xf32, #tpu.memory_space<vmem>>, %arg9: memref<8x1280xbf16, #tpu.memory_space<vmem>>, %arg10: memref<8x896xf32, #tpu.memory_space<vmem>>) attributes {dimension_semantics = [#tpu.dimension_semantics<parallel>, #tpu.dimension_semantics<arbitrary>], iteration_bounds = array<i64: 2, 5>, scalar_prefetch = 0 : i64, scratch_operands = 2 : i64, tpu.core_type = #tpu.core_type<tc>, window_params = [{pipeline_mode = #tpu.pipeline_mode<synchronous>, transform_indices = @transform_0, window_bounds = array<i64: 8, 100>}, {pipeline_mode = #tpu.pipeline_mode<synchronous>, transform_indices = @transform_1, window_bounds = array<i64: 100, 1280>}, {pipeline_mode = #tpu.pipeline_mode<synchronous>, transform_indices = @transform_2, window_bounds = array<i64: 1, 1280>}, {transform_indices = @transform_3, window_bounds = array<i64: 1280, 128>}, {transform_indices = @transform_4, window_bounds = array<i64: 1, 128>}, {transform_indices = @transform_5, window_bounds = array<i64: 128, 896>}, {transform_indices = @transform_6, window_bounds = array<i64: 1, 8, 896>}]} {
    %c0_i32 = arith.constant 0 : i32
    %0 = arith.cmpi eq, %arg1, %c0_i32 : i32
    %1 = arith.extui %0 : i1 to i32
    %c0_i32_0 = arith.constant 0 : i32
    %2 = arith.cmpi ne, %1, %c0_i32_0 : i32
    scf.if %2 {
      %c0_15 = arith.constant 0 : index
      %c0_16 = arith.constant 0 : index
      %20 = vector.load %arg2[%c0_15, %c0_16] : memref<8x100xf32, #tpu.memory_space<vmem>>, vector<8x100xf32>
      %21 = arith.truncf %20 : vector<8x100xf32> to vector<8x100xbf16>
      %c0_17 = arith.constant 0 : index
      %c0_18 = arith.constant 0 : index
      %22 = vector.load %arg3[%c0_17, %c0_18] : memref<100x1280xbf16, #tpu.memory_space<vmem>>, vector<100x1280xbf16>
      %cst_19 = arith.constant dense<0.000000e+00> : vector<8x1280xf32>
      %23 = tpu.matmul %21, %22, %cst_19 {dimension_numbers = #tpu.dot_dimension_numbers<[1], [0], [0], [1], [0, 0, 1, 1], [], []>} : vector<8x100xbf16>, vector<100x1280xbf16>, vector<8x1280xf32> -> vector<8x1280xf32>
      %c0_20 = arith.constant 0 : index
      %c0_21 = arith.constant 0 : index
      %24 = vector.load %arg4[%c0_20, %c0_21] : memref<1x1280xf32, #tpu.memory_space<vmem>>, vector<1x1280xf32>
      %25 = vector.broadcast %24 : vector<1x1280xf32> to vector<8x1280xf32>
      %26 = arith.addf %23, %25 : vector<8x1280xf32>
      %cst_22 = arith.constant 0.000000e+00 : f32
      %27 = vector.broadcast %cst_22 : f32 to vector<8x1280xf32>
      %28 = arith.maximumf %26, %27 : vector<8x1280xf32>
      %29 = arith.truncf %28 : vector<8x1280xf32> to vector<8x1280xbf16>
      %c0_23 = arith.constant 0 : index
      %c0_24 = arith.constant 0 : index
      %30 = vector.load %arg9[%c0_23, %c0_24] : memref<8x1280xbf16, #tpu.memory_space<vmem>>, vector<8x1280xbf16>
      tpu.vector_store %arg9[%c0_23, %c0_24], %29 {strides = array<i32>} : memref<8x1280xbf16, #tpu.memory_space<vmem>>, vector<8x1280xbf16>,
      %cst_25 = arith.constant 0.000000e+00 : f32
      %31 = vector.broadcast %cst_25 : f32 to vector<8x896xf32>
      %c0_26 = arith.constant 0 : index
      %c0_27 = arith.constant 0 : index
      %32 = vector.load %arg10[%c0_26, %c0_27] : memref<8x896xf32, #tpu.memory_space<vmem>>, vector<8x896xf32>
      tpu.vector_store %arg10[%c0_26, %c0_27], %31 {strides = array<i32>} : memref<8x896xf32, #tpu.memory_space<vmem>>, vector<8x896xf32>,
    } else {
    }
    %c0 = arith.constant 0 : index
    %c0_1 = arith.constant 0 : index
    %3 = vector.load %arg9[%c0, %c0_1] : memref<8x1280xbf16, #tpu.memory_space<vmem>>, vector<8x1280xbf16>
    %c0_2 = arith.constant 0 : index
    %c0_3 = arith.constant 0 : index
    %4 = vector.load %arg5[%c0_2, %c0_3] : memref<1280x128xbf16, #tpu.memory_space<vmem>>, vector<1280x128xbf16>
    %cst = arith.constant dense<0.000000e+00> : vector<8x128xf32>
    %5 = tpu.matmul %3, %4, %cst {dimension_numbers = #tpu.dot_dimension_numbers<[1], [0], [0], [1], [0, 0, 1, 1], [], []>} : vector<8x1280xbf16>, vector<1280x128xbf16>, vector<8x128xf32> -> vector<8x128xf32>
    %c0_4 = arith.constant 0 : index
    %c0_5 = arith.constant 0 : index
    %6 = vector.load %arg6[%c0_4, %c0_5] : memref<1x128xf32, #tpu.memory_space<vmem>>, vector<1x128xf32>
    %7 = vector.broadcast %6 : vector<1x128xf32> to vector<8x128xf32>
    %8 = arith.addf %5, %7 : vector<8x128xf32>
    %cst_6 = arith.constant 0.000000e+00 : f32
    %9 = vector.broadcast %cst_6 : f32 to vector<8x128xf32>
    %10 = arith.maximumf %8, %9 : vector<8x128xf32>
    %c0_7 = arith.constant 0 : index
    %c0_8 = arith.constant 0 : index
    %11 = vector.load %arg10[%c0_7, %c0_8] : memref<8x896xf32, #tpu.memory_space<vmem>>, vector<8x896xf32>
    %12 = arith.truncf %10 : vector<8x128xf32> to vector<8x128xbf16>
    %c0_9 = arith.constant 0 : index
    %c0_10 = arith.constant 0 : index
    %13 = vector.load %arg7[%c0_9, %c0_10] : memref<128x896xbf16, #tpu.memory_space<vmem>>, vector<128x896xbf16>
    %cst_11 = arith.constant dense<0.000000e+00> : vector<8x896xf32>
    %14 = tpu.matmul %12, %13, %cst_11 {dimension_numbers = #tpu.dot_dimension_numbers<[1], [0], [0], [1], [0, 0, 1, 1], [], []>} : vector<8x128xbf16>, vector<128x896xbf16>, vector<8x896xf32> -> vector<8x896xf32>
    %15 = arith.addf %11, %14 : vector<8x896xf32>
    %c0_12 = arith.constant 0 : index
    %c0_13 = arith.constant 0 : index
    %16 = vector.load %arg10[%c0_12, %c0_13] : memref<8x896xf32, #tpu.memory_space<vmem>>, vector<8x896xf32>
    tpu.vector_store %arg10[%c0_12, %c0_13], %15 {strides = array<i32>} : memref<8x896xf32, #tpu.memory_space<vmem>>, vector<8x896xf32>,
    %c4_i32 = arith.constant 4 : i32
    %17 = arith.cmpi eq, %arg1, %c4_i32 : i32
    %18 = arith.extui %17 : i1 to i32
    %c0_i32_14 = arith.constant 0 : i32
    %19 = arith.cmpi ne, %18, %c0_i32_14 : i32
    scf.if %19 {
      %c0_15 = arith.constant 0 : index
      %c0_16 = arith.constant 0 : index
      %20 = vector.load %arg10[%c0_15, %c0_16] : memref<8x896xf32, #tpu.memory_space<vmem>>, vector<8x896xf32>
      %c0_17 = arith.constant 0 : index
      %c0_18 = arith.constant 0 : index
      %c0_19 = arith.constant 0 : index
      %21 = vector.load %arg8[%c0_17, %c0_18, %c0_19] : memref<1x8x896xf32, #tpu.memory_space<vmem>>, vector<1x8x896xf32>
      %22 = vector.shape_cast %21 : vector<1x8x896xf32> to vector<8x896xf32>
      %23 = vector.shape_cast %20 : vector<8x896xf32> to vector<1x8x896xf32>
      tpu.vector_store %arg8[%c0_17, %c0_18, %c0_19], %23 {strides = array<i32>} : memref<1x8x896xf32, #tpu.memory_space<vmem>>, vector<1x8x896xf32>,
    } else {
    }
    return
  }
  func.func @transform_0(%arg0: i32, %arg1: i32) -> (i32, i32) {
    %c0_i32 = arith.constant 0 : i32
    %c0_i32_0 = arith.constant 0 : i32
    %c0_i32_1 = arith.constant 0 : i32
    return %c0_i32, %c0_i32_0 : i32, i32
  }
  func.func @transform_1(%arg0: i32, %arg1: i32) -> (i32, i32) {
    %c0_i32 = arith.constant 0 : i32
    %c0_i32_0 = arith.constant 0 : i32
    %c0_i32_1 = arith.constant 0 : i32
    return %c0_i32, %c0_i32_0 : i32, i32
  }
  func.func @transform_2(%arg0: i32, %arg1: i32) -> (i32, i32) {
    %c0_i32 = arith.constant 0 : i32
    %c0_i32_0 = arith.constant 0 : i32
    %c0_i32_1 = arith.constant 0 : i32
    return %c0_i32, %c0_i32_0 : i32, i32
  }
  func.func @transform_3(%arg0: i32, %arg1: i32) -> (i32, i32) {
    %c5_i32 = arith.constant 5 : i32
    %0 = arith.muli %arg0, %c5_i32 : i32
    %1 = arith.addi %0, %arg1 : i32
    %c0_i32 = arith.constant 0 : i32
    %c0_i32_0 = arith.constant 0 : i32
    return %c0_i32, %1 : i32, i32
  }
  func.func @transform_4(%arg0: i32, %arg1: i32) -> (i32, i32) {
    %c5_i32 = arith.constant 5 : i32
    %0 = arith.muli %arg0, %c5_i32 : i32
    %1 = arith.addi %0, %arg1 : i32
    %c0_i32 = arith.constant 0 : i32
    %c0_i32_0 = arith.constant 0 : i32
    return %c0_i32, %1 : i32, i32
  }
  func.func @transform_5(%arg0: i32, %arg1: i32) -> (i32, i32) {
    %c5_i32 = arith.constant 5 : i32
    %0 = arith.muli %arg0, %c5_i32 : i32
    %1 = arith.addi %0, %arg1 : i32
    %c0_i32 = arith.constant 0 : i32
    %c0_i32_0 = arith.constant 0 : i32
    return %1, %c0_i32 : i32, i32
  }
  func.func @transform_6(%arg0: i32, %arg1: i32) -> (i32, i32, i32) {
    %c0_i32 = arith.constant 0 : i32
    %c0_i32_0 = arith.constant 0 : i32
    %c0_i32_1 = arith.constant 0 : i32
    return %arg0, %c0_i32, %c0_i32_0 : i32, i32, i32
  }
}

</mosaic_0001>

<llo_original>
// kernel: generator_forward.1
$region0: #{generator_forward.1}
  #allocation0 [shape = 'u32[]', space=smem, size = 0x4, offset = 0x4, fixed_abs, tag = 'smem constant byte address 0x4 - core index']
  #allocation1 [shape = 'u32[144,128]{1,0:T(1,128)}', space=vmem, size = 0x12000, scoped, tag = 'internal scratch']
  #allocation2 [shape = 'bf16[8,1280]{1,0:T(8,128)(2,1)}', space=vmem, size = 0x5000, scoped, tag = 'scratch operand']
  #allocation3 [shape = 'f32[8,896]{1,0:T(8,128)}', space=vmem, size = 0x7000, scoped, tag = 'scratch operand']
  %s0 = inlined_call_operand.hbm [shape: f32[8,100], index: 0, kind: input, shape index: {}]
  %s1 = inlined_call_operand.hbm [shape: bf16[100,1280], index: 1, kind: input, shape index: {}]
  %s2 = inlined_call_operand.hbm [shape: f32[1,1280], index: 2, kind: input, shape index: {}]
  %s3 = inlined_call_operand.hbm [shape: bf16[1280,1280], index: 3, kind: input, shape index: {}]
  %s4 = inlined_call_operand.hbm [shape: f32[1,1280], index: 4, kind: input, shape index: {}]
  %s5 = inlined_call_operand.hbm [shape: bf16[1280,896], index: 5, kind: input, shape index: {}]
  %s6 = inlined_call_operand.vmem [shape: f32[2,8,896], index: 6, kind: output, shape index: {}]
  %s7 = sld [smem:[#allocation0]]
  $region89: #{generator_forward.1} parent=0
    _
  %s9 = ssub.s32 1, %s7
  %s10 = scalar_select 0, %s9, %s7
  $region1: #{generator_forward.1} parent=0
    #allocation4 [shape = 'u8[4096]{0}', space=vmem, size = 0x1000, scoped, tag = 'input window, operand 0, single buffered']
    #allocation5 [shape = 's32[2]{0}', space=sflag, size = 0x8, scoped, tag = 'scoped memory for generator_forward.1']
    #allocation6 [shape = 'u8[266240]{0}', space=vmem, size = 0x41000, scoped, tag = 'input window, operand 1, single buffered']
    #allocation7 [shape = 's32[1]{0}', space=sflag, size = 0x4, scoped, tag = 'scoped memory for generator_forward.1']
    #allocation8 [shape = 'u8[5120]{0}', space=vmem, size = 0x1400, scoped, tag = 'input window, operand 2, single buffered']
    #allocation9 [shape = 'u8[655360]{0}', space=vmem, size = 0xa0000, scoped, tag = 'input window, operand 3']
    #allocation10 [shape = 's32[2]{0}', space=sflag, size = 0x8, scoped, tag = 'scoped memory for generator_forward.1']
    #allocation11 [shape = 'u8[1024]{0}', space=vmem, size = 0x400, scoped, tag = 'input window, operand 4']
    #allocation12 [shape = 'u8[458752]{0}', space=vmem, size = 0x70000, scoped, tag = 'input window, operand 5']
    #allocation13 [shape = 's32[2]{0}', space=sflag, size = 0x8, scoped, tag = 'scoped memory for generator_forward.1']
    %11 = vsyncpa [#allocation5], 0
    %12 = vsyncpa [#allocation7], 0
    %13 = vsyncpa [#allocation10], 0
    %s14 = scalar_lea.sflag [#allocation10], 1
    %15 = vsyncpa %s14, 0
    %16 = vsyncpa [#allocation13], 0
    %s17 = scalar_lea.sflag [#allocation13], 1
    %18 = vsyncpa %s17, 0
    loop: start=0, step=1, limit=12
    $region2: #{generator_forward.1} parent=1 // loop_pre_header
      _
    $region3: #{generator_forward.1} parent=1 // loop_header
      %s20 = sphi 0, %s24
      %p21 = scmp.ge.s32.totalorder %s20, 12
      %s27 = sphi 0, %s39
      %s28 = sphi 0, %s35
      %s29 = sphi 0, %s27
      %s30 = sphi 0, %s28
      %s31 = sphi 0, %s29
      %s32 = sphi 0, %s30
      %s40 = sphi 0, %s40
      %s42 = sphi 0, %s40
      %s43 = sphi 0, %s42
      %s57 = sphi 0, %s43
      %s61 = sphi 0, %s61
      %s63 = sphi 0, %s61
      %s64 = sphi 0, %s63
      %s78 = sphi 0, %s64
      %s82 = sphi 0, %s82
      %s84 = sphi 0, %s82
      %s85 = sphi 0, %s84
      %s99 = sphi 0, %s85
      %s109 = sphi 0, %s111
      %s112 = sphi 0, %s109
      %s113 = sphi 0, %s112
      %s129 = sphi 0, %s113
      %s139 = sphi 0, %s141
      %s142 = sphi 0, %s139
      %s143 = sphi 0, %s142
      %s159 = sphi 0, %s143
      %s169 = sphi 0, %s171
      %s172 = sphi 0, %s169
      %s173 = sphi 0, %s172
      %s189 = sphi 0, %s173
      %s195 = sphi 0, %s197
      %s198 = sphi 0, %s195
      %s199 = sphi 0, %s198
      %s215 = sphi 0, %s199
    $region4: #{generator_forward.1} parent=1 // loop_header_branch
      %23 = sbr.rel (%p21) target = $region8
    $region5: #{generator_forward.1} parent=1 // loop_body
      %s25 = ssub.s32 %s20, 1
      %s26 = ssub.s32 %s20, 2
      %s33 = sadd.s32 1, %s28
      %p34 = scmp.ge.s32.totalorder %s33, 5
      %s35 = scalar_select %p34, 0, %s33
      %s36 = sadd.s32 1, %s27
      %s37 = scalar_select %p34, %s36, %s27
      %p38 = scmp.ge.s32.totalorder %s37, 2
      %s39 = scalar_select %p38, 0, %s37
      %s41 = sadd.s32 %s40, 1
      %p44 = scmp.eq.s32.totalorder %s20, 9
      %p45 = scmp.ne.s32.totalorder %s40, %s42
      %p46 = scmp.eq.s32.totalorder %s20, 0
      %p47 = por %p45, %p46
      %p48 = scmp.ne.s32.totalorder %s40, %s42
      %p49 = scmp.eq.s32.totalorder %s25, 9
      %p50 = por %p48, %p49
      %p51 = scmp.ne.s32.totalorder %s42, %s43
      %p52 = scmp.eq.s32.totalorder %s25, 0
      %p53 = por %p51, %p52
      %p54 = scmp.ne.s32.totalorder %s42, %s43
      %p55 = scmp.eq.s32.totalorder %s26, 9
      %p56 = por %p54, %p55
      %p58 = scmp.ne.s32.totalorder %s43, %s57
      %p59 = scmp.eq.s32.totalorder %s26, 0
      %p60 = por %p58, %p59
      %s62 = sadd.s32 %s61, 1
      %p65 = scmp.eq.s32.totalorder %s20, 9
      %p66 = scmp.ne.s32.totalorder %s61, %s63
      %p67 = scmp.eq.s32.totalorder %s20, 0
      %p68 = por %p66, %p67
      %p69 = scmp.ne.s32.totalorder %s61, %s63
      %p70 = scmp.eq.s32.totalorder %s25, 9
      %p71 = por %p69, %p70
      %p72 = scmp.ne.s32.totalorder %s63, %s64
      %p73 = scmp.eq.s32.totalorder %s25, 0
      %p74 = por %p72, %p73
      %p75 = scmp.ne.s32.totalorder %s63, %s64
      %p76 = scmp.eq.s32.totalorder %s26, 9
      %p77 = por %p75, %p76
      %p79 = scmp.ne.s32.totalorder %s64, %s78
      %p80 = scmp.eq.s32.totalorder %s26, 0
      %p81 = por %p79, %p80
      %s83 = sadd.s32 %s82, 1
      %p86 = scmp.eq.s32.totalorder %s20, 9
      %p87 = scmp.ne.s32.totalorder %s82, %s84
      %p88 = scmp.eq.s32.totalorder %s20, 0
      %p89 = por %p87, %p88
      %p90 = scmp.ne.s32.totalorder %s82, %s84
      %p91 = scmp.eq.s32.totalorder %s25, 9
      %p92 = por %p90, %p91
      %p93 = scmp.ne.s32.totalorder %s84, %s85
      %p94 = scmp.eq.s32.totalorder %s25, 0
      %p95 = por %p93, %p94
      %p96 = scmp.ne.s32.totalorder %s84, %s85
      %p97 = scmp.eq.s32.totalorder %s26, 9
      %p98 = por %p96, %p97
      %p100 = scmp.ne.s32.totalorder %s85, %s99
      %p101 = scmp.eq.s32.totalorder %s26, 0
      %p102 = por %p100, %p101
      %s103 = smul.u32 %s27, 5
      %s104 = sadd.s32 %s103, %s28
      %s105 = smul.u32 %s39, 5
      %s106 = sadd.s32 %s105, %s35
      %s107 = ssub.s32 %s104, %s106
      %p108 = scmp.eq.s32.totalorder %s107, 0
      %s110 = sadd.s32 %s109, 1
      %s111 = scalar_select %p108, %s109, %s110
      %p114 = pneg %p108
      %p115 = scmp.eq.s32.totalorder %s20, 9
      %p116 = por %p114, %p115
      %p117 = scmp.ne.s32.totalorder %s109, %s112
      %p118 = scmp.eq.s32.totalorder %s20, 0
      %p119 = por %p117, %p118
      %p120 = scmp.ne.s32.totalorder %s109, %s112
      %p121 = scmp.eq.s32.totalorder %s25, 9
      %p122 = por %p120, %p121
      %p123 = scmp.ne.s32.totalorder %s112, %s113
      %p124 = scmp.eq.s32.totalorder %s25, 0
      %p125 = por %p123, %p124
      %p126 = scmp.ne.s32.totalorder %s112, %s113
      %p127 = scmp.eq.s32.totalorder %s26, 9
      %p128 = por %p126, %p127
      %p130 = scmp.ne.s32.totalorder %s113, %s129
      %p131 = scmp.eq.s32.totalorder %s26, 0
      %p132 = por %p130, %p131
      %s133 = smul.u32 %s27, 5
      %s134 = sadd.s32 %s133, %s28
      %s135 = smul.u32 %s39, 5
      %s136 = sadd.s32 %s135, %s35
      %s137 = ssub.s32 %s134, %s136
      %p138 = scmp.eq.s32.totalorder %s137, 0
      %s140 = sadd.s32 %s139, 1
      %s141 = scalar_select %p138, %s139, %s140
      %p144 = pneg %p138
      %p145 = scmp.eq.s32.totalorder %s20, 9
      %p146 = por %p144, %p145
      %p147 = scmp.ne.s32.totalorder %s139, %s142
      %p148 = scmp.eq.s32.totalorder %s20, 0
      %p149 = por %p147, %p148
      %p150 = scmp.ne.s32.totalorder %s139, %s142
      %p151 = scmp.eq.s32.totalorder %s25, 9
      %p152 = por %p150, %p151
      %p153 = scmp.ne.s32.totalorder %s142, %s143
      %p154 = scmp.eq.s32.totalorder %s25, 0
      %p155 = por %p153, %p154
      %p156 = scmp.ne.s32.totalorder %s142, %s143
      %p157 = scmp.eq.s32.totalorder %s26, 9
      %p158 = por %p156, %p157
      %p160 = scmp.ne.s32.totalorder %s143, %s159
      %p161 = scmp.eq.s32.totalorder %s26, 0
      %p162 = por %p160, %p161
      %s163 = smul.u32 %s27, 5
      %s164 = sadd.s32 %s163, %s28
      %s165 = smul.u32 %s39, 5
      %s166 = sadd.s32 %s165, %s35
      %s167 = ssub.s32 %s164, %s166
      %p168 = scmp.eq.s32.totalorder %s167, 0
      %s170 = sadd.s32 %s169, 1
      %s171 = scalar_select %p168, %s169, %s170
      %p174 = pneg %p168
      %p175 = scmp.eq.s32.totalorder %s20, 9
      %p176 = por %p174, %p175
      %p177 = scmp.ne.s32.totalorder %s169, %s172
      %p178 = scmp.eq.s32.totalorder %s20, 0
      %p179 = por %p177, %p178
      %p180 = scmp.ne.s32.totalorder %s169, %s172
      %p181 = scmp.eq.s32.totalorder %s25, 9
      %p182 = por %p180, %p181
      %p183 = scmp.ne.s32.totalorder %s172, %s173
      %p184 = scmp.eq.s32.totalorder %s25, 0
      %p185 = por %p183, %p184
      %p186 = scmp.ne.s32.totalorder %s172, %s173
      %p187 = scmp.eq.s32.totalorder %s26, 9
      %p188 = por %p186, %p187
      %p190 = scmp.ne.s32.totalorder %s173, %s189
      %p191 = scmp.eq.s32.totalorder %s26, 0
      %p192 = por %p190, %p191
      %s193 = ssub.s32 %s27, %s39
      %p194 = scmp.eq.s32.totalorder %s193, 0
      %s196 = sadd.s32 %s195, 1
      %s197 = scalar_select %p194, %s195, %s196
      %p200 = pneg %p194
      %p201 = scmp.eq.s32.totalorder %s20, 9
      %p202 = por %p200, %p201
      %p203 = scmp.ne.s32.totalorder %s195, %s198
      %p204 = scmp.eq.s32.totalorder %s20, 0
      %p205 = por %p203, %p204
      %p206 = scmp.ne.s32.totalorder %s195, %s198
      %p207 = scmp.eq.s32.totalorder %s25, 9
      %p208 = por %p206, %p207
      %p209 = scmp.ne.s32.totalorder %s198, %s199
      %p210 = scmp.eq.s32.totalorder %s25, 0
      %p211 = por %p209, %p210
      %p212 = scmp.ne.s32.totalorder %s198, %s199
      %p213 = scmp.eq.s32.totalorder %s26, 9
      %p214 = por %p212, %p213
      %p216 = scmp.ne.s32.totalorder %s199, %s215
      %p217 = scmp.eq.s32.totalorder %s26, 0
      %p218 = por %p216, %p217
      %p219 = scmp.le.s32.totalorder 1, %s20
      %p220 = scmp.lt.s32.totalorder %s20, 11
      %p221 = pnand %p219, %p220
      %p222 = pneg %p221
      // Predicated region
      $region9: #{generator_forward.1} parent=5 // pred_check
        _
      $region10: #{generator_forward.1} parent=5 // pred_check_branch
        %224 = sbr.rel (%p221) target = $region12
      $region11: #{generator_forward.1} parent=5 // pred_region
        %s225 = ssub.s32 %s20, 1
        // Predicated region
        $region13: #{generator_forward.1} parent=11 // pred_check
          %p226 = pneg %p53
        $region14: #{generator_forward.1} parent=11 // pred_check_branch
          %228 = sbr.rel (%p226) target = $region16
        $region15: #{generator_forward.1} parent=11 // pred_region
          %s230 = ssub.s32 128, 128
          %231 = vsyncadd [#allocation5], %s230
          %s233 = sshll.u32 [#allocation4], 4
          %s234 = int_to_ptr.vmem [resolvable:$true] %s233
          %236 = dma.hbm_to_vmem [thread:$0]  %s0, 128, %s234, [#allocation5]
        $region16: #{generator_forward.1} parent=11 // pred_fallthru
          _
        // Predicated region
        $region17: #{generator_forward.1} parent=11 // pred_check
          %p237 = pneg %p74
        $region18: #{generator_forward.1} parent=11 // pred_check_branch
          %239 = sbr.rel (%p237) target = $region20
        $region19: #{generator_forward.1} parent=11 // pred_region
          %s241 = ssub.s32 8320, 8320
          %242 = vsyncadd [#allocation7], %s241
          %s243 = sshll.u32 [#allocation6], 4
          %s244 = int_to_ptr.vmem [resolvable:$true] %s243
          %249 = dma.hbm_to_vmem [thread:$0]  %s1, 8320, %s244, [#allocation7], 640, 640, 40
        $region20: #{generator_forward.1} parent=11 // pred_fallthru
          _
        // Predicated region
        $region21: #{generator_forward.1} parent=11 // pred_check
          %p250 = pneg %p95
        $region22: #{generator_forward.1} parent=11 // pred_check_branch
          %252 = sbr.rel (%p250) target = $region24
        $region23: #{generator_forward.1} parent=11 // pred_region
          %s254 = ssub.s32 160, 160
          %255 = vsyncadd [#allocation7], %s254
          %s257 = sshll.u32 [#allocation8], 4
          %s258 = int_to_ptr.vmem [resolvable:$true] %s257
          %260 = dma.hbm_to_vmem [thread:$0]  %s2, 160, %s258, [#allocation7]
        $region24: #{generator_forward.1} parent=11 // pred_fallthru
          _
      $region12: #{generator_forward.1} parent=5 // pred_fallthru
        _
      %p261 = scmp.lt.s32.totalorder %s20, 10
      // Predicated region
      $region25: #{generator_forward.1} parent=5 // pred_check
        %p262 = pneg %p261
      $region26: #{generator_forward.1} parent=5 // pred_check_branch
        %264 = sbr.rel (%p262) target = $region28
      $region27: #{generator_forward.1} parent=5 // pred_region
        // Predicated region
        $region29: #{generator_forward.1} parent=27 // pred_check
          %p265 = pneg %p119
        $region30: #{generator_forward.1} parent=27 // pred_check_branch
          %267 = sbr.rel (%p265) target = $region32
        $region31: #{generator_forward.1} parent=27 // pred_region
          %s268 = sand.u32 %s20, 1
          %s269 = scalar_lea.sflag [#allocation10], %s268
          %s270 = sand.u32 %s109, 1
          %s271 = smul.addr %s270, 640
          %s272 = scalar_lea.vmem [#allocation9], %s271
          %s273 = smul.u32 %s27, 5
          %s274 = sadd.s32 %s273, %s28
          %s276 = ssub.s32 10240, 10240
          %277 = vsyncadd %s269, %s276
          %s278 = smul.addr %s274, 64
          %s279 = scalar_lea.hbm %s3, %s278
          %s280 = sshll.u32 %s272, 4
          %s281 = int_to_ptr.vmem [resolvable:$true] %s280
          %286 = dma.hbm_to_vmem [thread:$0]  %s279, 10240, %s281, %s269, 640, 64, 4
        $region32: #{generator_forward.1} parent=27 // pred_fallthru
          _
        // Predicated region
        $region33: #{generator_forward.1} parent=27 // pred_check
          %p287 = pneg %p149
        $region34: #{generator_forward.1} parent=27 // pred_check_branch
          %289 = sbr.rel (%p287) target = $region36
        $region35: #{generator_forward.1} parent=27 // pred_region
          %s290 = sand.u32 %s20, 1
          %s291 = scalar_lea.sflag [#allocation10], %s290
          %s292 = sand.u32 %s139, 1
          %s293 = scalar_lea.vmem [#allocation11], %s292
          %s294 = smul.u32 %s27, 5
          %s295 = sadd.s32 %s294, %s28
          %s297 = ssub.s32 16, 16
          %298 = vsyncadd %s291, %s297
          %s299 = smul.addr %s295, 16
          %s300 = scalar_lea.hbm %s4, %s299
          %s302 = sshll.u32 %s293, 4
          %s303 = int_to_ptr.vmem [resolvable:$true] %s302
          %305 = dma.hbm_to_vmem [thread:$0]  %s300, 16, %s303, %s291
        $region36: #{generator_forward.1} parent=27 // pred_fallthru
          _
        // Predicated region
        $region37: #{generator_forward.1} parent=27 // pred_check
          %p306 = pneg %p179
        $region38: #{generator_forward.1} parent=27 // pred_check_branch
          %308 = sbr.rel (%p306) target = $region40
        $region39: #{generator_forward.1} parent=27 // pred_region
          %s309 = sand.u32 %s169, 1
          %s310 = scalar_lea.sflag [#allocation13], %s309
          %s311 = sand.u32 %s169, 1
          %s312 = smul.addr %s311, 448
          %s313 = scalar_lea.vmem [#allocation12], %s312
          %s314 = smul.u32 %s27, 5
          %s315 = sadd.s32 %s314, %s28
          %s316 = smul.u32 16, %s315
          %s318 = ssub.s32 7168, 7168
          %319 = vsyncadd %s310, %s318
          %s320 = smul.addr %s316, 7
          %s321 = smul.addr %s320, 64
          %s322 = scalar_lea.hbm %s5, %s321
          %s323 = sshll.u32 %s313, 4
          %s324 = int_to_ptr.vmem [resolvable:$true] %s323
          %329 = dma.hbm_to_vmem [thread:$0]  %s322, 7168, %s324, %s310, 448, 448, 28
        $region40: #{generator_forward.1} parent=27 // pred_fallthru
          _
      $region28: #{generator_forward.1} parent=5 // pred_fallthru
        _
      %p330 = scmp.le.s32.totalorder 1, %s20
      %p331 = scmp.lt.s32.totalorder %s20, 11
      %p332 = pnand %p330, %p331
      %p333 = pneg %p332
      // Predicated region
      $region41: #{generator_forward.1} parent=5 // pred_check
        _
      $region42: #{generator_forward.1} parent=5 // pred_check_branch
        %335 = sbr.rel (%p332) target = $region44
      $region43: #{generator_forward.1} parent=5 // pred_region
        %s336 = ssub.s32 %s20, 1
        // Predicated region
        $region45: #{generator_forward.1} parent=43 // pred_check
          %p337 = pneg %p53
        $region46: #{generator_forward.1} parent=43 // pred_check_branch
          %339 = sbr.rel (%p337) target = $region48
        $region47: #{generator_forward.1} parent=43 // pred_region
          %340 = dma.done [#allocation5], 128
        $region48: #{generator_forward.1} parent=43 // pred_fallthru
          _
        // Predicated region
        $region49: #{generator_forward.1} parent=43 // pred_check
          %p341 = pneg %p74
        $region50: #{generator_forward.1} parent=43 // pred_check_branch
          %343 = sbr.rel (%p341) target = $region52
        $region51: #{generator_forward.1} parent=43 // pred_region
          %344 = dma.done [#allocation7], 8320
        $region52: #{generator_forward.1} parent=43 // pred_fallthru
          _
        // Predicated region
        $region53: #{generator_forward.1} parent=43 // pred_check
          %p345 = pneg %p95
        $region54: #{generator_forward.1} parent=43 // pred_check_branch
          %347 = sbr.rel (%p345) target = $region56
        $region55: #{generator_forward.1} parent=43 // pred_region
          %348 = dma.done [#allocation7], 160
        $region56: #{generator_forward.1} parent=43 // pred_fallthru
          _
        %s349 = sand.u32 %s25, 1
        %s350 = scalar_lea.sflag [#allocation10], %s349
        %s351 = sand.u32 %s112, 1
        %s352 = smul.addr %s351, 640
        %s353 = scalar_lea.vmem [#allocation9], %s352
        // Predicated region
        $region57: #{generator_forward.1} parent=43 // pred_check
          %p354 = pneg %p125
        $region58: #{generator_forward.1} parent=43 // pred_check_branch
          %356 = sbr.rel (%p354) target = $region60
        $region59: #{generator_forward.1} parent=43 // pred_region
          %357 = dma.done %s350, 10240
        $region60: #{generator_forward.1} parent=43 // pred_fallthru
          _
        %s358 = sand.u32 %s25, 1
        %s359 = scalar_lea.sflag [#allocation10], %s358
        %s360 = sand.u32 %s142, 1
        %s361 = scalar_lea.vmem [#allocation11], %s360
        // Predicated region
        $region61: #{generator_forward.1} parent=43 // pred_check
          %p362 = pneg %p155
        $region62: #{generator_forward.1} parent=43 // pred_check_branch
          %364 = sbr.rel (%p362) target = $region64
        $region63: #{generator_forward.1} parent=43 // pred_region
          %365 = dma.done %s359, 16
        $region64: #{generator_forward.1} parent=43 // pred_fallthru
          _
        %s366 = sand.u32 %s172, 1
        %s367 = scalar_lea.sflag [#allocation13], %s366
        %s368 = sand.u32 %s172, 1
        %s369 = smul.addr %s368, 448
        %s370 = scalar_lea.vmem [#allocation12], %s369
        // Predicated region
        $region65: #{generator_forward.1} parent=43 // pred_check
          %p371 = pneg %p185
        $region66: #{generator_forward.1} parent=43 // pred_check_branch
          %373 = sbr.rel (%p371) target = $region68
        $region67: #{generator_forward.1} parent=43 // pred_region
          %374 = dma.done %s367, 7168
        $region68: #{generator_forward.1} parent=43 // pred_fallthru
          _
        %p375 = pneg %p53
        %p376 = pneg %p50
        %p377 = pneg %p74
        %p378 = pneg %p71
        %p379 = pneg %p95
        %p380 = pneg %p92
        %s381 = sand.u32 %s25, 1
        %s382 = scalar_lea.sflag [#allocation10], %s381
        %s383 = sand.u32 %s112, 1
        %s384 = smul.addr %s383, 640
        %s385 = scalar_lea.vmem [#allocation9], %s384
        %p386 = pneg %p125
        %p387 = pneg %p122
        %s388 = sand.u32 %s25, 1
        %s389 = scalar_lea.sflag [#allocation10], %s388
        %s390 = sand.u32 %s142, 1
        %s391 = scalar_lea.vmem [#allocation11], %s390
        %p392 = pneg %p155
        %p393 = pneg %p152
        %s394 = sand.u32 %s172, 1
        %s395 = scalar_lea.sflag [#allocation13], %s394
        %s396 = sand.u32 %s172, 1
        %s397 = smul.addr %s396, 448
        %s398 = scalar_lea.vmem [#allocation12], %s397
        %p399 = pneg %p185
        %p400 = pneg %p182
        %p401 = pneg %p211
        %p402 = pneg %p208
        %p403 = scmp.lt.s32.totalorder %s29, 1
        %s404 = scalar_select %p403, %s29, 1
        %s405 = smul.addr %s404, 7
        %s406 = smul.addr %s405, 8
        %s407 = scalar_lea.vmem %s6, %s406
        %s408 = smul.u32 %s29, 5
        %s409 = sadd.s32 %s408, %s30
        %s410 = smul.u32 %s29, 5
        %s411 = sadd.s32 %s410, %s30
        %s412 = smul.u32 %s29, 5
        %s413 = sadd.s32 %s412, %s30
        %s414 = smul.u32 16, %s413
        %p415 = scmp.lt.s32.totalorder %s29, 1
        %s416 = scalar_select %p415, %s29, 1
        %s417 = smul.addr %s416, 7
        %s418 = smul.addr %s417, 8
        %s419 = scalar_lea.vmem %s6, %s418
        %p421 = scmp.eq.s32.totalorder %s30, 0
        // Predicated region
        $region69: #{generator_forward.1} parent=43 // pred_check
          %p422 = pneg %p421
        $region70: #{generator_forward.1} parent=43 // pred_check_branch
          %424 = sbr.rel (%p422) target = $region72
        $region71: #{generator_forward.1} parent=43 // pred_region
          %v425 = vld [vmem:[#allocation4] sm:$0xff]
          %v426 = vpack.c.bf16 %v425, %v425
          %v427 = vld [vmem:[#allocation6] sm:$0xff]
          %v428 = vld [vmem:[#allocation6 + $0x8] sm:$0xff]
          %v429 = vld [vmem:[#allocation6 + $0x10] sm:$0xff]
          %v430 = vld [vmem:[#allocation6 + $0x18] sm:$0xff]
          %v431 = vld [vmem:[#allocation6 + $0x20] sm:$0xff]
          %v432 = vld [vmem:[#allocation6 + $0x28] sm:$0xff]
          %v433 = vld [vmem:[#allocation6 + $0x30] sm:$0xff]
          %v434 = vld [vmem:[#allocation6 + $0x38] sm:$0xff]
          %v435 = vld [vmem:[#allocation6 + $0x40] sm:$0xff]
          %v436 = vld [vmem:[#allocation6 + $0x48] sm:$0xff]
          %v437 = vld [vmem:[#allocation6 + $0x50] sm:$0xff]
          %v438 = vld [vmem:[#allocation6 + $0x58] sm:$0xff]
          %v439 = vld [vmem:[#allocation6 + $0x60] sm:$0xff]
          %v440 = vld [vmem:[#allocation6 + $0x68] sm:$0xff]
          %v441 = vld [vmem:[#allocation6 + $0x70] sm:$0xff]
          %v442 = vld [vmem:[#allocation6 + $0x78] sm:$0xff]
          %v443 = vld [vmem:[#allocation6 + $0x80] sm:$0xff]
          %v444 = vld [vmem:[#allocation6 + $0x88] sm:$0xff]
          %v445 = vld [vmem:[#allocation6 + $0x90] sm:$0xff]
          %v446 = vld [vmem:[#allocation6 + $0x98] sm:$0xff]
          %v447 = vld [vmem:[#allocation6 + $0xa0] sm:$0xff]
          %v448 = vld [vmem:[#allocation6 + $0xa8] sm:$0xff]
          %v449 = vld [vmem:[#allocation6 + $0xb0] sm:$0xff]
          %v450 = vld [vmem:[#allocation6 + $0xb8] sm:$0xff]
          %v451 = vld [vmem:[#allocation6 + $0xc0] sm:$0xff]
          %v452 = vld [vmem:[#allocation6 + $0xc8] sm:$0xff]
          %v453 = vld [vmem:[#allocation6 + $0xd0] sm:$0xff]
          %v454 = vld [vmem:[#allocation6 + $0xd8] sm:$0xff]
          %v455 = vld [vmem:[#allocation6 + $0xe0] sm:$0xff]
          %v456 = vld [vmem:[#allocation6 + $0xe8] sm:$0xff]
          %v457 = vld [vmem:[#allocation6 + $0xf0] sm:$0xff]
          %v458 = vld [vmem:[#allocation6 + $0xf8] sm:$0xff]
          %v459 = vld [vmem:[#allocation6 + $0x100] sm:$0xff]
          %v460 = vld [vmem:[#allocation6 + $0x108] sm:$0xff]
          %v461 = vld [vmem:[#allocation6 + $0x110] sm:$0xff]
          %v462 = vld [vmem:[#allocation6 + $0x118] sm:$0xff]
          %v463 = vld [vmem:[#allocation6 + $0x120] sm:$0xff]
          %v464 = vld [vmem:[#allocation6 + $0x128] sm:$0xff]
          %v465 = vld [vmem:[#allocation6 + $0x130] sm:$0xff]
          %v466 = vld [vmem:[#allocation6 + $0x138] sm:$0xff]
          %v467 = vld [vmem:[#allocation6 + $0x140] sm:$0xff]
          %v468 = vld [vmem:[#allocation6 + $0x148] sm:$0xff]
          %v469 = vld [vmem:[#allocation6 + $0x150] sm:$0xff]
          %v470 = vld [vmem:[#allocation6 + $0x158] sm:$0xff]
          %v471 = vld [vmem:[#allocation6 + $0x160] sm:$0xff]
          %v472 = vld [vmem:[#allocation6 + $0x168] sm:$0xff]
          %v473 = vld [vmem:[#allocation6 + $0x170] sm:$0xff]
          %v474 = vld [vmem:[#allocation6 + $0x178] sm:$0xff]
          %v475 = vld [vmem:[#allocation6 + $0x180] sm:$0xff]
          %v476 = vld [vmem:[#allocation6 + $0x188] sm:$0xff]
          %v477 = vld [vmem:[#allocation6 + $0x190] sm:$0xff]
          %v478 = vld [vmem:[#allocation6 + $0x198] sm:$0xff]
          %v479 = vld [vmem:[#allocation6 + $0x1a0] sm:$0xff]
          %v480 = vld [vmem:[#allocation6 + $0x1a8] sm:$0xff]
          %v481 = vld [vmem:[#allocation6 + $0x1b0] sm:$0xff]
          %v482 = vld [vmem:[#allocation6 + $0x1b8] sm:$0xff]
          %v483 = vld [vmem:[#allocation6 + $0x1c0] sm:$0xff]
          %v484 = vld [vmem:[#allocation6 + $0x1c8] sm:$0xff]
          %v485 = vld [vmem:[#allocation6 + $0x1d0] sm:$0xff]
          %v486 = vld [vmem:[#allocation6 + $0x1d8] sm:$0xff]
          %v487 = vld [vmem:[#allocation6 + $0x1e0] sm:$0x33]
          %v488 = vld [vmem:[#allocation6 + $0x1e8] sm:$0x33]
          %v489 = vld [vmem:[#allocation6 + $0x1f0] sm:$0x33]
          %v490 = vld [vmem:[#allocation6 + $0x1f8] sm:$0x33]
          %v491 = vld [vmem:[#allocation6 + $0x200] sm:$0x33]
          %v492 = vld [vmem:[#allocation8] sm:$0xff]
          %v493 = vld [vmem:[#allocation8 + $0x8] sm:$0x3]
          %v496 = vlaneseq
          %v497 = vshrl.u32 %v496, 7
          %v498 = vsub.s32 0, %v497
          %v499 = vrot.slane %v492, %v498
          %v500 = vlaneseq
          %v501 = vshrl.u32 %v500, 7
          %v502 = vsub.s32 1, %v501
          %v503 = vrot.slane %v492, %v502
          %v504 = vlaneseq
          %v505 = vshrl.u32 %v504, 7
          %v506 = vsub.s32 2, %v505
          %v507 = vrot.slane %v492, %v506
          %v508 = vlaneseq
          %v509 = vshrl.u32 %v508, 7
          %v510 = vsub.s32 3, %v509
          %v511 = vrot.slane %v492, %v510
          %v512 = vlaneseq
          %v513 = vshrl.u32 %v512, 7
          %v514 = vsub.s32 4, %v513
          %v515 = vrot.slane %v492, %v514
          %v516 = vlaneseq
          %v517 = vshrl.u32 %v516, 7
          %v518 = vsub.s32 5, %v517
          %v519 = vrot.slane %v492, %v518
          %v520 = vlaneseq
          %v521 = vshrl.u32 %v520, 7
          %v522 = vsub.s32 6, %v521
          %v523 = vrot.slane %v492, %v522
          %v524 = vlaneseq
          %v525 = vshrl.u32 %v524, 7
          %v526 = vsub.s32 7, %v525
          %v527 = vrot.slane %v492, %v526
          %v528 = vlaneseq
          %v529 = vshrl.u32 %v528, 7
          %v530 = vsub.s32 0, %v529
          %v531 = vrot.slane %v493, %v530
          %v532 = vlaneseq
          %v533 = vshrl.u32 %v532, 7
          %v534 = vsub.s32 1, %v533
          %v535 = vrot.slane %v493, %v534
          %v611 = vunpack.c.l.b16 %v427
          %v612 = vunpack.c.h.b16 %v427
          %v613 = vunpack.c.l.b16 %v428
          %v614 = vunpack.c.h.b16 %v428
          %v615 = vunpack.c.l.b16 %v429
          %v616 = vunpack.c.h.b16 %v429
          %v617 = vunpack.c.l.b16 %v430
          %v618 = vunpack.c.h.b16 %v430
          %v619 = vunpack.c.l.b16 %v431
          %v620 = vunpack.c.h.b16 %v431
          %v621 = vunpack.c.l.b16 %v432
          %v622 = vunpack.c.h.b16 %v432
          %v623 = vunpack.c.l.b16 %v433
          %v624 = vunpack.c.h.b16 %v433
          %v625 = vunpack.c.l.b16 %v434
          %v626 = vunpack.c.h.b16 %v434
          %v627 = vunpack.c.l.b16 %v435
          %v628 = vunpack.c.h.b16 %v435
          %v629 = vunpack.c.l.b16 %v436
          %v630 = vunpack.c.h.b16 %v436
          %v631 = vunpack.c.l.b16 %v437
          %v632 = vunpack.c.h.b16 %v437
          %v633 = vunpack.c.l.b16 %v438
          %v634 = vunpack.c.h.b16 %v438
          %v635 = vunpack.c.l.b16 %v439
          %v636 = vunpack.c.h.b16 %v439
          %v637 = vunpack.c.l.b16 %v440
          %v638 = vunpack.c.h.b16 %v440
          %v639 = vunpack.c.l.b16 %v441
          %v640 = vunpack.c.h.b16 %v441
          %v641 = vunpack.c.l.b16 %v442
          %v642 = vunpack.c.h.b16 %v442
          %v643 = vunpack.c.l.b16 %v443
          %v644 = vunpack.c.h.b16 %v443
          %v645 = vunpack.c.l.b16 %v444
          %v646 = vunpack.c.h.b16 %v444
          %v647 = vunpack.c.l.b16 %v445
          %v648 = vunpack.c.h.b16 %v445
          %v649 = vunpack.c.l.b16 %v446
          %v650 = vunpack.c.h.b16 %v446
          %v651 = vunpack.c.l.b16 %v447
          %v652 = vunpack.c.h.b16 %v447
          %v653 = vunpack.c.l.b16 %v448
          %v654 = vunpack.c.h.b16 %v448
          %v655 = vunpack.c.l.b16 %v449
          %v656 = vunpack.c.h.b16 %v449
          %v657 = vunpack.c.l.b16 %v450
          %v658 = vunpack.c.h.b16 %v450
          %v659 = vunpack.c.l.b16 %v451
          %v660 = vunpack.c.h.b16 %v451
          %v661 = vunpack.c.l.b16 %v452
          %v662 = vunpack.c.h.b16 %v452
          %v663 = vunpack.c.l.b16 %v453
          %v664 = vunpack.c.h.b16 %v453
          %v665 = vunpack.c.l.b16 %v454
          %v666 = vunpack.c.h.b16 %v454
          %v667 = vunpack.c.l.b16 %v455
          %v668 = vunpack.c.h.b16 %v455
          %v669 = vunpack.c.l.b16 %v456
          %v670 = vunpack.c.h.b16 %v456
          %v671 = vunpack.c.l.b16 %v457
          %v672 = vunpack.c.h.b16 %v457
          %v673 = vunpack.c.l.b16 %v458
          %v674 = vunpack.c.h.b16 %v458
          %v675 = vunpack.c.l.b16 %v459
          %v676 = vunpack.c.h.b16 %v459
          %v677 = vunpack.c.l.b16 %v460
          %v678 = vunpack.c.h.b16 %v460
          %v679 = vunpack.c.l.b16 %v461
          %v680 = vunpack.c.h.b16 %v461
          %v681 = vunpack.c.l.b16 %v462
          %v682 = vunpack.c.h.b16 %v462
          %v683 = vunpack.c.l.b16 %v463
          %v684 = vunpack.c.h.b16 %v463
          %v685 = vunpack.c.l.b16 %v464
          %v686 = vunpack.c.h.b16 %v464
          %v687 = vunpack.c.l.b16 %v465
          %v688 = vunpack.c.h.b16 %v465
          %v689 = vunpack.c.l.b16 %v466
          %v690 = vunpack.c.h.b16 %v466
          %v691 = vunpack.c.l.b16 %v467
          %v692 = vunpack.c.h.b16 %v467
          %v693 = vunpack.c.l.b16 %v468
          %v694 = vunpack.c.h.b16 %v468
          %v695 = vunpack.c.l.b16 %v469
          %v696 = vunpack.c.h.b16 %v469
          %v697 = vunpack.c.l.b16 %v470
          %v698 = vunpack.c.h.b16 %v470
          %v699 = vunpack.c.l.b16 %v471
          %v700 = vunpack.c.h.b16 %v471
          %v701 = vunpack.c.l.b16 %v472
          %v702 = vunpack.c.h.b16 %v472
          %v703 = vunpack.c.l.b16 %v473
          %v704 = vunpack.c.h.b16 %v473
          %v705 = vunpack.c.l.b16 %v474
          %v706 = vunpack.c.h.b16 %v474
          %v707 = vunpack.c.l.b16 %v475
          %v708 = vunpack.c.h.b16 %v475
          %v709 = vunpack.c.l.b16 %v476
          %v710 = vunpack.c.h.b16 %v476
          %v711 = vunpack.c.l.b16 %v477
          %v712 = vunpack.c.h.b16 %v477
          %v713 = vunpack.c.l.b16 %v478
          %v714 = vunpack.c.h.b16 %v478
          %v715 = vunpack.c.l.b16 %v479
          %v716 = vunpack.c.h.b16 %v479
          %v717 = vunpack.c.l.b16 %v480
          %v718 = vunpack.c.h.b16 %v480
          %v719 = vunpack.c.l.b16 %v481
          %v720 = vunpack.c.h.b16 %v481
          %v721 = vunpack.c.l.b16 %v482
          %v722 = vunpack.c.h.b16 %v482
          %v723 = vunpack.c.l.b16 %v483
          %v724 = vunpack.c.h.b16 %v483
          %v725 = vunpack.c.l.b16 %v484
          %v726 = vunpack.c.h.b16 %v484
          %v727 = vunpack.c.l.b16 %v485
          %v728 = vunpack.c.h.b16 %v485
          %v729 = vunpack.c.l.b16 %v486
          %v730 = vunpack.c.h.b16 %v486
          %v731 = vunpack.c.l.b16 %v487
          %v732 = vunpack.c.h.b16 %v487
          %v733 = vunpack.c.l.b16 %v488
          %v734 = vunpack.c.h.b16 %v488
          %v735 = vunpack.c.l.b16 %v489
          %v736 = vunpack.c.h.b16 %v489
          %v737 = vunpack.c.l.b16 %v490
          %v738 = vunpack.c.h.b16 %v490
          %v739 = vunpack.c.l.b16 %v491
          %v740 = vunpack.c.h.b16 %v491
          %v741 = vpack.c.b16 %v621, %v611
          %v742 = vpack.c.b16 %v622, %v612
          %v743 = vpack.c.b16 %v623, %v613
          %v744 = vpack.c.b16 %v624, %v614
          %v745 = vpack.c.b16 %v625, %v615
          %v746 = vpack.c.b16 %v626, %v616
          %v747 = vpack.c.b16 %v627, %v617
          %v748 = vpack.c.b16 %v628, %v618
          %v749 = vpack.c.b16 %v629, %v619
          %v750 = vpack.c.b16 %v630, %v620
          %v751 = vpack.c.b16 %v641, %v631
          %v752 = vpack.c.b16 %v642, %v632
          %v753 = vpack.c.b16 %v643, %v633
          %v754 = vpack.c.b16 %v644, %v634
          %v755 = vpack.c.b16 %v645, %v635
          %v756 = vpack.c.b16 %v646, %v636
          %v757 = vpack.c.b16 %v647, %v637
          %v758 = vpack.c.b16 %v648, %v638
          %v759 = vpack.c.b16 %v649, %v639
          %v760 = vpack.c.b16 %v650, %v640
          %v761 = vpack.c.b16 %v661, %v651
          %v762 = vpack.c.b16 %v662, %v652
          %v763 = vpack.c.b16 %v663, %v653
          %v764 = vpack.c.b16 %v664, %v654
          %v765 = vpack.c.b16 %v665, %v655
          %v766 = vpack.c.b16 %v666, %v656
          %v767 = vpack.c.b16 %v667, %v657
          %v768 = vpack.c.b16 %v668, %v658
          %v769 = vpack.c.b16 %v669, %v659
          %v770 = vpack.c.b16 %v670, %v660
          %v771 = vpack.c.b16 %v681, %v671
          %v772 = vpack.c.b16 %v682, %v672
          %v773 = vpack.c.b16 %v683, %v673
          %v774 = vpack.c.b16 %v684, %v674
          %v775 = vpack.c.b16 %v685, %v675
          %v776 = vpack.c.b16 %v686, %v676
          %v777 = vpack.c.b16 %v687, %v677
          %v778 = vpack.c.b16 %v688, %v678
          %v779 = vpack.c.b16 %v689, %v679
          %v780 = vpack.c.b16 %v690, %v680
          %v781 = vpack.c.b16 %v701, %v691
          %v782 = vpack.c.b16 %v702, %v692
          %v783 = vpack.c.b16 %v703, %v693
          %v784 = vpack.c.b16 %v704, %v694
          %v785 = vpack.c.b16 %v705, %v695
          %v786 = vpack.c.b16 %v706, %v696
          %v787 = vpack.c.b16 %v707, %v697
          %v788 = vpack.c.b16 %v708, %v698
          %v789 = vpack.c.b16 %v709, %v699
          %v790 = vpack.c.b16 %v710, %v700
          %v791 = vpack.c.b16 %v721, %v711
          %v792 = vpack.c.b16 %v722, %v712
          %v793 = vpack.c.b16 %v723, %v713
          %v794 = vpack.c.b16 %v724, %v714
          %v795 = vpack.c.b16 %v725, %v715
          %v796 = vpack.c.b16 %v726, %v716
          %v797 = vpack.c.b16 %v727, %v717
          %v798 = vpack.c.b16 %v728, %v718
          %v799 = vpack.c.b16 %v729, %v719
          %v800 = vpack.c.b16 %v730, %v720
          %v801 = vpack.c.b16 %v731, %v731
          %v802 = vpack.c.b16 %v732, %v732
          %v803 = vpack.c.b16 %v733, %v733
          %v804 = vpack.c.b16 %v734, %v734
          %v805 = vpack.c.b16 %v735, %v735
          %v806 = vpack.c.b16 %v736, %v736
          %v807 = vpack.c.b16 %v737, %v737
          %v808 = vpack.c.b16 %v738, %v738
          %v809 = vpack.c.b16 %v739, %v739
          %v810 = vpack.c.b16 %v740, %v740
          %vm871 = vcmask 818176
          %v873 = vsel %vm871, %v426, 0
          %vm875 = vcmask 1041408
          %v877 = vsel %vm875, %v801, 0
          %v880 = vsel %vm875, %v802, 0
          %v883 = vsel %vm875, %v803, 0
          %v886 = vsel %vm875, %v804, 0
          %v889 = vsel %vm875, %v805, 0
          %v892 = vsel %vm875, %v806, 0
          %v895 = vsel %vm875, %v807, 0
          %v898 = vsel %vm875, %v808, 0
          %v901 = vsel %vm875, %v809, 0
          %v904 = vsel %vm875, %v810, 0
          %906 = vmatprep.subr.bf16.mxu0 %v742
          %907 = vmatpush1.bf16.msra.mxu0 %v741
          %908 = vmatprep.subr.bf16.mxu0 %v752
          %909 = vmatpush1.bf16.msra.mxu0 %v751
          %910 = vmatprep.subr.bf16.mxu0 %v762
          %911 = vmatpush1.bf16.msra.mxu0 %v761
          %912 = vmatprep.subr.bf16.mxu0 %v772
          %913 = vmatpush1.bf16.msra.mxu0 %v771
          %914 = vmatprep.subr.bf16.mxu0 %v782
          %915 = vmatpush1.bf16.msra.mxu0 %v781
          %916 = vmatprep.subr.bf16.mxu0 %v792
          %917 = vmatpush1.bf16.msra.mxu0 %v791
          %918 = vmatprep.subr.bf16.mxu0 %v880
          %919 = vmatpush1.bf16.msra.mxu0 %v877
          %920 = vmatprep.subr.bf16.mxu0 0
          %921 = vmatpush1.bf16.msra.mxu0 0
          %922 = vmatprep.subr.bf16.mxu0 0
          %923 = vmatpush1.bf16.msra.mxu0 0
          %924 = vmatprep.subr.bf16.mxu0 0
          %925 = vmatpush1.bf16.msra.mxu0 0
          %926 = vmatprep.subr.bf16.mxu0 0
          %927 = vmatpush1.bf16.msra.mxu0 0
          %928 = vmatprep.subr.bf16.mxu0 0
          %929 = vmatpush1.bf16.msra.mxu0 0
          %930 = vmatprep.subr.bf16.mxu0 0
          %931 = vmatpush1.bf16.msra.mxu0 0
          %932 = vmatprep.subr.bf16.mxu0 0
          %933 = vmatpush1.bf16.msra.mxu0 0
          %934 = vmatprep.subr.bf16.mxu0 0
          %935 = vmatpush1.bf16.msra.mxu0 0
          %936 = vmatprep.subr.bf16.mxu0 0
          %937 = vmatpush1.bf16.msra.mxu0 0
          %938 = vmatprep.mubr.bf16.mxu0 0
          %939 = vmatmul.mubr.bf16.gmra.mrb[0].mxu0 %v873
          %v940 = vpop.f32.mrb[0].mxu0
          %v941 = vadd.f32 %v499, %v940
          %v942 = vpop.f32.mrb[0].mxu0
          %v943 = vadd.f32 %v503, %v942
          %v944 = vpop.f32.mrb[0].mxu0
          %v945 = vpop.f32.mrb[0].mxu0
          %946 = vdwg.mxu0
          %947 = vmatprep.subr.bf16.mxu0 %v744
          %948 = vmatpush1.bf16.msra.mxu0 %v743
          %949 = vmatprep.subr.bf16.mxu0 %v754
          %950 = vmatpush1.bf16.msra.mxu0 %v753
          %951 = vmatprep.subr.bf16.mxu0 %v764
          %952 = vmatpush1.bf16.msra.mxu0 %v763
          %953 = vmatprep.subr.bf16.mxu0 %v774
          %954 = vmatpush1.bf16.msra.mxu0 %v773
          %955 = vmatprep.subr.bf16.mxu0 %v784
          %956 = vmatpush1.bf16.msra.mxu0 %v783
          %957 = vmatprep.subr.bf16.mxu0 %v794
          %958 = vmatpush1.bf16.msra.mxu0 %v793
          %959 = vmatprep.subr.bf16.mxu0 %v886
          %960 = vmatpush1.bf16.msra.mxu0 %v883
          %961 = vmatprep.subr.bf16.mxu0 0
          %962 = vmatpush1.bf16.msra.mxu0 0
          %963 = vmatprep.subr.bf16.mxu0 0
          %964 = vmatpush1.bf16.msra.mxu0 0
          %965 = vmatprep.subr.bf16.mxu0 0
          %966 = vmatpush1.bf16.msra.mxu0 0
          %967 = vmatprep.subr.bf16.mxu0 0
          %968 = vmatpush1.bf16.msra.mxu0 0
          %969 = vmatprep.subr.bf16.mxu0 0
          %970 = vmatpush1.bf16.msra.mxu0 0
          %971 = vmatprep.subr.bf16.mxu0 0
          %972 = vmatpush1.bf16.msra.mxu0 0
          %973 = vmatprep.subr.bf16.mxu0 0
          %974 = vmatpush1.bf16.msra.mxu0 0
          %975 = vmatprep.subr.bf16.mxu0 0
          %976 = vmatpush1.bf16.msra.mxu0 0
          %977 = vmatprep.subr.bf16.mxu0 0
          %978 = vmatpush1.bf16.msra.mxu0 0
          %979 = vmatprep.mubr.bf16.mxu0 0
          %980 = vmatmul.mubr.bf16.gmra.mrb[0].mxu0 %v873
          %v981 = vpop.f32.mrb[0].mxu0
          %v982 = vadd.f32 %v507, %v981
          %v983 = vpop.f32.mrb[0].mxu0
          %v984 = vadd.f32 %v511, %v983
          %v985 = vpop.f32.mrb[0].mxu0
          %v986 = vpop.f32.mrb[0].mxu0
          %987 = vdwg.mxu0
          %988 = vmatprep.subr.bf16.mxu0 %v746
          %989 = vmatpush1.bf16.msra.mxu0 %v745
          %990 = vmatprep.subr.bf16.mxu0 %v756
          %991 = vmatpush1.bf16.msra.mxu0 %v755
          %992 = vmatprep.subr.bf16.mxu0 %v766
          %993 = vmatpush1.bf16.msra.mxu0 %v765
          %994 = vmatprep.subr.bf16.mxu0 %v776
          %995 = vmatpush1.bf16.msra.mxu0 %v775
          %996 = vmatprep.subr.bf16.mxu0 %v786
          %997 = vmatpush1.bf16.msra.mxu0 %v785
          %998 = vmatprep.subr.bf16.mxu0 %v796
          %999 = vmatpush1.bf16.msra.mxu0 %v795
          %1000 = vmatprep.subr.bf16.mxu0 %v892
          %1001 = vmatpush1.bf16.msra.mxu0 %v889
          %1002 = vmatprep.subr.bf16.mxu0 0
          %1003 = vmatpush1.bf16.msra.mxu0 0
          %1004 = vmatprep.subr.bf16.mxu0 0
          %1005 = vmatpush1.bf16.msra.mxu0 0
          %1006 = vmatprep.subr.bf16.mxu0 0
          %1007 = vmatpush1.bf16.msra.mxu0 0
          %1008 = vmatprep.subr.bf16.mxu0 0
          %1009 = vmatpush1.bf16.msra.mxu0 0
          %1010 = vmatprep.subr.bf16.mxu0 0
          %1011 = vmatpush1.bf16.msra.mxu0 0
          %1012 = vmatprep.subr.bf16.mxu0 0
          %1013 = vmatpush1.bf16.msra.mxu0 0
          %1014 = vmatprep.subr.bf16.mxu0 0
          %1015 = vmatpush1.bf16.msra.mxu0 0
          %1016 = vmatprep.subr.bf16.mxu0 0
          %1017 = vmatpush1.bf16.msra.mxu0 0
          %1018 = vmatprep.subr.bf16.mxu0 0
          %1019 = vmatpush1.bf16.msra.mxu0 0
          %1020 = vmatprep.mubr.bf16.mxu0 0
          %1021 = vmatmul.mubr.bf16.gmra.mrb[0].mxu0 %v873
          %v1022 = vpop.f32.mrb[0].mxu0
          %v1023 = vadd.f32 %v515, %v1022
          %v1024 = vpop.f32.mrb[0].mxu0
          %v1025 = vadd.f32 %v519, %v1024
          %v1026 = vpop.f32.mrb[0].mxu0
          %v1027 = vpop.f32.mrb[0].mxu0
          %1028 = vdwg.mxu0
          %1029 = vmatprep.subr.bf16.mxu0 %v748
          %1030 = vmatpush1.bf16.msra.mxu0 %v747
          %1031 = vmatprep.subr.bf16.mxu0 %v758
          %1032 = vmatpush1.bf16.msra.mxu0 %v757
          %1033 = vmatprep.subr.bf16.mxu0 %v768
          %1034 = vmatpush1.bf16.msra.mxu0 %v767
          %1035 = vmatprep.subr.bf16.mxu0 %v778
          %1036 = vmatpush1.bf16.msra.mxu0 %v777
          %1037 = vmatprep.subr.bf16.mxu0 %v788
          %1038 = vmatpush1.bf16.msra.mxu0 %v787
          %1039 = vmatprep.subr.bf16.mxu0 %v798
          %1040 = vmatpush1.bf16.msra.mxu0 %v797
          %1041 = vmatprep.subr.bf16.mxu0 %v898
          %1042 = vmatpush1.bf16.msra.mxu0 %v895
          %1043 = vmatprep.subr.bf16.mxu0 0
          %1044 = vmatpush1.bf16.msra.mxu0 0
          %1045 = vmatprep.subr.bf16.mxu0 0
          %1046 = vmatpush1.bf16.msra.mxu0 0
          %1047 = vmatprep.subr.bf16.mxu0 0
          %1048 = vmatpush1.bf16.msra.mxu0 0
          %1049 = vmatprep.subr.bf16.mxu0 0
          %1050 = vmatpush1.bf16.msra.mxu0 0
          %1051 = vmatprep.subr.bf16.mxu0 0
          %1052 = vmatpush1.bf16.msra.mxu0 0
          %1053 = vmatprep.subr.bf16.mxu0 0
          %1054 = vmatpush1.bf16.msra.mxu0 0
          %1055 = vmatprep.subr.bf16.mxu0 0
          %1056 = vmatpush1.bf16.msra.mxu0 0
          %1057 = vmatprep.subr.bf16.mxu0 0
          %1058 = vmatpush1.bf16.msra.mxu0 0
          %1059 = vmatprep.subr.bf16.mxu0 0
          %1060 = vmatpush1.bf16.msra.mxu0 0
          %1061 = vmatprep.mubr.bf16.mxu0 0
          %1062 = vmatmul.mubr.bf16.gmra.mrb[0].mxu0 %v873
          %v1063 = vpop.f32.mrb[0].mxu0
          %v1064 = vadd.f32 %v523, %v1063
          %v1065 = vpop.f32.mrb[0].mxu0
          %v1066 = vadd.f32 %v527, %v1065
          %v1067 = vpop.f32.mrb[0].mxu0
          %v1068 = vpop.f32.mrb[0].mxu0
          %1069 = vdwg.mxu0
          %1070 = vmatprep.subr.bf16.mxu0 %v750
          %1071 = vmatpush1.bf16.msra.mxu0 %v749
          %1072 = vmatprep.subr.bf16.mxu0 %v760
          %1073 = vmatpush1.bf16.msra.mxu0 %v759
          %1074 = vmatprep.subr.bf16.mxu0 %v770
          %1075 = vmatpush1.bf16.msra.mxu0 %v769
          %1076 = vmatprep.subr.bf16.mxu0 %v780
          %1077 = vmatpush1.bf16.msra.mxu0 %v779
          %1078 = vmatprep.subr.bf16.mxu0 %v790
          %1079 = vmatpush1.bf16.msra.mxu0 %v789
          %1080 = vmatprep.subr.bf16.mxu0 %v800
          %1081 = vmatpush1.bf16.msra.mxu0 %v799
          %1082 = vmatprep.subr.bf16.mxu0 %v904
          %1083 = vmatpush1.bf16.msra.mxu0 %v901
          %1084 = vmatprep.subr.bf16.mxu0 0
          %1085 = vmatpush1.bf16.msra.mxu0 0
          %1086 = vmatprep.subr.bf16.mxu0 0
          %1087 = vmatpush1.bf16.msra.mxu0 0
          %1088 = vmatprep.subr.bf16.mxu0 0
          %1089 = vmatpush1.bf16.msra.mxu0 0
          %1090 = vmatprep.subr.bf16.mxu0 0
          %1091 = vmatpush1.bf16.msra.mxu0 0
          %1092 = vmatprep.subr.bf16.mxu0 0
          %1093 = vmatpush1.bf16.msra.mxu0 0
          %1094 = vmatprep.subr.bf16.mxu0 0
          %1095 = vmatpush1.bf16.msra.mxu0 0
          %1096 = vmatprep.subr.bf16.mxu0 0
          %1097 = vmatpush1.bf16.msra.mxu0 0
          %1098 = vmatprep.subr.bf16.mxu0 0
          %1099 = vmatpush1.bf16.msra.mxu0 0
          %1100 = vmatprep.subr.bf16.mxu0 0
          %1101 = vmatpush1.bf16.msra.mxu0 0
          %1102 = vmatprep.mubr.bf16.mxu0 0
          %1103 = vmatmul.mubr.bf16.gmra.mrb[0].mxu0 %v873
          %v1104 = vpop.f32.mrb[0].mxu0
          %v1105 = vadd.f32 %v531, %v1104
          %v1106 = vpop.f32.mrb[0].mxu0
          %v1107 = vadd.f32 %v535, %v1106
          %v1108 = vpop.f32.mrb[0].mxu0
          %v1109 = vpop.f32.mrb[0].mxu0
          %1110 = vdwg.mxu0
          %v1111 = vmax.f32 %v941, 0.0
          %v1112 = vmax.f32 %v943, 0.0
          %v1113 = vmax.f32 %v982, 0.0
          %v1114 = vmax.f32 %v984, 0.0
          %v1115 = vmax.f32 %v1023, 0.0
          %v1116 = vmax.f32 %v1025, 0.0
          %v1117 = vmax.f32 %v1064, 0.0
          %v1118 = vmax.f32 %v1066, 0.0
          %v1119 = vmax.f32 %v1105, 0.0
          %v1120 = vmax.f32 %v1107, 0.0
          %v1121 = vpack.c.bf16 %v1111, %v1111
          %v1122 = vpack.c.bf16 %v1112, %v1112
          %v1123 = vpack.c.bf16 %v1113, %v1113
          %v1124 = vpack.c.bf16 %v1114, %v1114
          %v1125 = vpack.c.bf16 %v1115, %v1115
          %v1126 = vpack.c.bf16 %v1116, %v1116
          %v1127 = vpack.c.bf16 %v1117, %v1117
          %v1128 = vpack.c.bf16 %v1118, %v1118
          %v1129 = vpack.c.bf16 %v1119, %v1119
          %v1130 = vpack.c.bf16 %v1120, %v1120
          %v1141 = vunpack.c.l.b16 %v1121
          %v1142 = vunpack.c.l.b16 %v1122
          %v1143 = vunpack.c.l.b16 %v1123
          %v1144 = vunpack.c.l.b16 %v1124
          %v1145 = vunpack.c.l.b16 %v1125
          %v1146 = vunpack.c.l.b16 %v1126
          %v1147 = vunpack.c.l.b16 %v1127
          %v1148 = vunpack.c.l.b16 %v1128
          %v1149 = vunpack.c.l.b16 %v1129
          %v1150 = vunpack.c.l.b16 %v1130
          %v1151 = vpack.c.b16 %v1142, %v1141
          %v1152 = vpack.c.b16 %v1144, %v1143
          %v1153 = vpack.c.b16 %v1146, %v1145
          %v1154 = vpack.c.b16 %v1148, %v1147
          %v1155 = vpack.c.b16 %v1150, %v1149
          %1161 = vst [vmem:[#allocation2] sm:$0xff] %v1151
          %1162 = vst [vmem:[#allocation2 + $0x8] sm:$0xff] %v1152
          %1163 = vst [vmem:[#allocation2 + $0x10] sm:$0xff] %v1153
          %1164 = vst [vmem:[#allocation2 + $0x18] sm:$0xff] %v1154
          %1165 = vst [vmem:[#allocation2 + $0x20] sm:$0xff] %v1155
          %1166 = vst [vmem:[#allocation3] sm:$0xff] 0.0
          %1167 = vst [vmem:[#allocation3 + $0x8] sm:$0xff] 0.0
          %1168 = vst [vmem:[#allocation3 + $0x10] sm:$0xff] 0.0
          %1169 = vst [vmem:[#allocation3 + $0x18] sm:$0xff] 0.0
          %1170 = vst [vmem:[#allocation3 + $0x20] sm:$0xff] 0.0
          %1171 = vst [vmem:[#allocation3 + $0x28] sm:$0xff] 0.0
          %1172 = vst [vmem:[#allocation3 + $0x30] sm:$0xff] 0.0
        $region72: #{generator_forward.1} parent=43 // pred_fallthru
          _
        %v1173 = vld [vmem:[#allocation2] sm:$0xff]
        %v1174 = vld [vmem:[#allocation2 + $0x8] sm:$0xff]
        %v1175 = vld [vmem:[#allocation2 + $0x10] sm:$0xff]
        %v1176 = vld [vmem:[#allocation2 + $0x18] sm:$0xff]
        %v1177 = vld [vmem:[#allocation2 + $0x20] sm:$0xff]
        %v1178 = vld [vmem:[%s353] sm:$0xf]
        %v1179 = vld [vmem:[%s353 + $0x4] sm:$0xf]
        %v1180 = vld [vmem:[%s353 + $0x8] sm:$0xf]
        %v1181 = vld [vmem:[%s353 + $0xc] sm:$0xf]
        %v1182 = vld [vmem:[%s353 + $0x10] sm:$0xf]
        %v1183 = vld [vmem:[%s353 + $0x14] sm:$0xf]
        %v1184 = vld [vmem:[%s353 + $0x18] sm:$0xf]
        %v1185 = vld [vmem:[%s353 + $0x1c] sm:$0xf]
        %v1186 = vld [vmem:[%s353 + $0x20] sm:$0xf]
        %v1187 = vld [vmem:[%s353 + $0x24] sm:$0xf]
        %v1188 = vld [vmem:[%s353 + $0x28] sm:$0xf]
        %v1189 = vld [vmem:[%s353 + $0x2c] sm:$0xf]
        %v1190 = vld [vmem:[%s353 + $0x30] sm:$0xf]
        %v1191 = vld [vmem:[%s353 + $0x34] sm:$0xf]
        %v1192 = vld [vmem:[%s353 + $0x38] sm:$0xf]
        %v1193 = vld [vmem:[%s353 + $0x3c] sm:$0xf]
        %v1194 = vld [vmem:[%s353 + $0x40] sm:$0xf]
        %v1195 = vld [vmem:[%s353 + $0x44] sm:$0xf]
        %v1196 = vld [vmem:[%s353 + $0x48] sm:$0xf]
        %v1197 = vld [vmem:[%s353 + $0x4c] sm:$0xf]
        %v1198 = vld [vmem:[%s353 + $0x50] sm:$0xf]
        %v1199 = vld [vmem:[%s353 + $0x54] sm:$0xf]
        %v1200 = vld [vmem:[%s353 + $0x58] sm:$0xf]
        %v1201 = vld [vmem:[%s353 + $0x5c] sm:$0xf]
        %v1202 = vld [vmem:[%s353 + $0x60] sm:$0xf]
        %v1203 = vld [vmem:[%s353 + $0x64] sm:$0xf]
        %v1204 = vld [vmem:[%s353 + $0x68] sm:$0xf]
        %v1205 = vld [vmem:[%s353 + $0x6c] sm:$0xf]
        %v1206 = vld [vmem:[%s353 + $0x70] sm:$0xf]
        %v1207 = vld [vmem:[%s353 + $0x74] sm:$0xf]
        %v1208 = vld [vmem:[%s353 + $0x78] sm:$0xf]
        %v1209 = vld [vmem:[%s353 + $0x7c] sm:$0xf]
        %v1210 = vld [vmem:[%s353 + $0x80] sm:$0xf]
        %v1211 = vld [vmem:[%s353 + $0x84] sm:$0xf]
        %v1212 = vld [vmem:[%s353 + $0x88] sm:$0xf]
        %v1213 = vld [vmem:[%s353 + $0x8c] sm:$0xf]
        %v1214 = vld [vmem:[%s353 + $0x90] sm:$0xf]
        %v1215 = vld [vmem:[%s353 + $0x94] sm:$0xf]
        %v1216 = vld [vmem:[%s353 + $0x98] sm:$0xf]
        %v1217 = vld [vmem:[%s353 + $0x9c] sm:$0xf]
        %v1218 = vld [vmem:[%s353 + $0xa0] sm:$0xf]
        %v1219 = vld [vmem:[%s353 + $0xa4] sm:$0xf]
        %v1220 = vld [vmem:[%s353 + $0xa8] sm:$0xf]
        %v1221 = vld [vmem:[%s353 + $0xac] sm:$0xf]
        %v1222 = vld [vmem:[%s353 + $0xb0] sm:$0xf]
        %v1223 = vld [vmem:[%s353 + $0xb4] sm:$0xf]
        %v1224 = vld [vmem:[%s353 + $0xb8] sm:$0xf]
        %v1225 = vld [vmem:[%s353 + $0xbc] sm:$0xf]
        %v1226 = vld [vmem:[%s353 + $0xc0] sm:$0xf]
        %v1227 = vld [vmem:[%s353 + $0xc4] sm:$0xf]
        %v1228 = vld [vmem:[%s353 + $0xc8] sm:$0xf]
        %v1229 = vld [vmem:[%s353 + $0xcc] sm:$0xf]
        %v1230 = vld [vmem:[%s353 + $0xd0] sm:$0xf]
        %v1231 = vld [vmem:[%s353 + $0xd4] sm:$0xf]
        %v1232 = vld [vmem:[%s353 + $0xd8] sm:$0xf]
        %v1233 = vld [vmem:[%s353 + $0xdc] sm:$0xf]
        %v1234 = vld [vmem:[%s353 + $0xe0] sm:$0xf]
        %v1235 = vld [vmem:[%s353 + $0xe4] sm:$0xf]
        %v1236 = vld [vmem:[%s353 + $0xe8] sm:$0xf]
        %v1237 = vld [vmem:[%s353 + $0xec] sm:$0xf]
        %v1238 = vld [vmem:[%s353 + $0xf0] sm:$0xf]
        %v1239 = vld [vmem:[%s353 + $0xf4] sm:$0xf]
        %v1240 = vld [vmem:[%s353 + $0xf8] sm:$0xf]
        %v1241 = vld [vmem:[%s353 + $0xfc] sm:$0xf]
        %v1242 = vld [vmem:[%s353 + $0x100] sm:$0xf]
        %v1243 = vld [vmem:[%s353 + $0x104] sm:$0xf]
        %v1244 = vld [vmem:[%s353 + $0x108] sm:$0xf]
        %v1245 = vld [vmem:[%s353 + $0x10c] sm:$0xf]
        %v1246 = vld [vmem:[%s353 + $0x110] sm:$0xf]
        %v1247 = vld [vmem:[%s353 + $0x114] sm:$0xf]
        %v1248 = vld [vmem:[%s353 + $0x118] sm:$0xf]
        %v1249 = vld [vmem:[%s353 + $0x11c] sm:$0xf]
        %v1250 = vld [vmem:[%s353 + $0x120] sm:$0xf]
        %v1251 = vld [vmem:[%s353 + $0x124] sm:$0xf]
        %v1252 = vld [vmem:[%s353 + $0x128] sm:$0xf]
        %v1253 = vld [vmem:[%s353 + $0x12c] sm:$0xf]
        %v1254 = vld [vmem:[%s353 + $0x130] sm:$0xf]
        %v1255 = vld [vmem:[%s353 + $0x134] sm:$0xf]
        %v1256 = vld [vmem:[%s353 + $0x138] sm:$0xf]
        %v1257 = vld [vmem:[%s353 + $0x13c] sm:$0xf]
        %v1258 = vld [vmem:[%s353 + $0x140] sm:$0xf]
        %v1259 = vld [vmem:[%s353 + $0x144] sm:$0xf]
        %v1260 = vld [vmem:[%s353 + $0x148] sm:$0xf]
        %v1261 = vld [vmem:[%s353 + $0x14c] sm:$0xf]
        %v1262 = vld [vmem:[%s353 + $0x150] sm:$0xf]
        %v1263 = vld [vmem:[%s353 + $0x154] sm:$0xf]
        %v1264 = vld [vmem:[%s353 + $0x158] sm:$0xf]
        %v1265 = vld [vmem:[%s353 + $0x15c] sm:$0xf]
        %v1266 = vld [vmem:[%s353 + $0x160] sm:$0xf]
        %v1267 = vld [vmem:[%s353 + $0x164] sm:$0xf]
        %v1268 = vld [vmem:[%s353 + $0x168] sm:$0xf]
        %v1269 = vld [vmem:[%s353 + $0x16c] sm:$0xf]
        %v1270 = vld [vmem:[%s353 + $0x170] sm:$0xf]
        %v1271 = vld [vmem:[%s353 + $0x174] sm:$0xf]
        %v1272 = vld [vmem:[%s353 + $0x178] sm:$0xf]
        %v1273 = vld [vmem:[%s353 + $0x17c] sm:$0xf]
        %v1274 = vld [vmem:[%s353 + $0x180] sm:$0xf]
        %v1275 = vld [vmem:[%s353 + $0x184] sm:$0xf]
        %v1276 = vld [vmem:[%s353 + $0x188] sm:$0xf]
        %v1277 = vld [vmem:[%s353 + $0x18c] sm:$0xf]
        %v1278 = vld [vmem:[%s353 + $0x190] sm:$0xf]
        %v1279 = vld [vmem:[%s353 + $0x194] sm:$0xf]
        %v1280 = vld [vmem:[%s353 + $0x198] sm:$0xf]
        %v1281 = vld [vmem:[%s353 + $0x19c] sm:$0xf]
        %v1282 = vld [vmem:[%s353 + $0x1a0] sm:$0xf]
        %v1283 = vld [vmem:[%s353 + $0x1a4] sm:$0xf]
        %v1284 = vld [vmem:[%s353 + $0x1a8] sm:$0xf]
        %v1285 = vld [vmem:[%s353 + $0x1ac] sm:$0xf]
        %v1286 = vld [vmem:[%s353 + $0x1b0] sm:$0xf]
        %v1287 = vld [vmem:[%s353 + $0x1b4] sm:$0xf]
        %v1288 = vld [vmem:[%s353 + $0x1b8] sm:$0xf]
        %v1289 = vld [vmem:[%s353 + $0x1bc] sm:$0xf]
        %v1290 = vld [vmem:[%s353 + $0x1c0] sm:$0xf]
        %v1291 = vld [vmem:[%s353 + $0x1c4] sm:$0xf]
        %v1292 = vld [vmem:[%s353 + $0x1c8] sm:$0xf]
        %v1293 = vld [vmem:[%s353 + $0x1cc] sm:$0xf]
        %v1294 = vld [vmem:[%s353 + $0x1d0] sm:$0xf]
        %v1295 = vld [vmem:[%s353 + $0x1d4] sm:$0xf]
        %v1296 = vld [vmem:[%s353 + $0x1d8] sm:$0xf]
        %v1297 = vld [vmem:[%s353 + $0x1dc] sm:$0xf]
        %v1298 = vld [vmem:[%s353 + $0x1e0] sm:$0xf]
        %v1299 = vld [vmem:[%s353 + $0x1e4] sm:$0xf]
        %v1300 = vld [vmem:[%s353 + $0x1e8] sm:$0xf]
        %v1301 = vld [vmem:[%s353 + $0x1ec] sm:$0xf]
        %v1302 = vld [vmem:[%s353 + $0x1f0] sm:$0xf]
        %v1303 = vld [vmem:[%s353 + $0x1f4] sm:$0xf]
        %v1304 = vld [vmem:[%s353 + $0x1f8] sm:$0xf]
        %v1305 = vld [vmem:[%s353 + $0x1fc] sm:$0xf]
        %v1306 = vld [vmem:[%s353 + $0x200] sm:$0xf]
        %v1307 = vld [vmem:[%s353 + $0x204] sm:$0xf]
        %v1308 = vld [vmem:[%s353 + $0x208] sm:$0xf]
        %v1309 = vld [vmem:[%s353 + $0x20c] sm:$0xf]
        %v1310 = vld [vmem:[%s353 + $0x210] sm:$0xf]
        %v1311 = vld [vmem:[%s353 + $0x214] sm:$0xf]
        %v1312 = vld [vmem:[%s353 + $0x218] sm:$0xf]
        %v1313 = vld [vmem:[%s353 + $0x21c] sm:$0xf]
        %v1314 = vld [vmem:[%s353 + $0x220] sm:$0xf]
        %v1315 = vld [vmem:[%s353 + $0x224] sm:$0xf]
        %v1316 = vld [vmem:[%s353 + $0x228] sm:$0xf]
        %v1317 = vld [vmem:[%s353 + $0x22c] sm:$0xf]
        %v1318 = vld [vmem:[%s353 + $0x230] sm:$0xf]
        %v1319 = vld [vmem:[%s353 + $0x234] sm:$0xf]
        %v1320 = vld [vmem:[%s353 + $0x238] sm:$0xf]
        %v1321 = vld [vmem:[%s353 + $0x23c] sm:$0xf]
        %v1322 = vld [vmem:[%s353 + $0x240] sm:$0xf]
        %v1323 = vld [vmem:[%s353 + $0x244] sm:$0xf]
        %v1324 = vld [vmem:[%s353 + $0x248] sm:$0xf]
        %v1325 = vld [vmem:[%s353 + $0x24c] sm:$0xf]
        %v1326 = vld [vmem:[%s353 + $0x250] sm:$0xf]
        %v1327 = vld [vmem:[%s353 + $0x254] sm:$0xf]
        %v1328 = vld [vmem:[%s353 + $0x258] sm:$0xf]
        %v1329 = vld [vmem:[%s353 + $0x25c] sm:$0xf]
        %v1330 = vld [vmem:[%s353 + $0x260] sm:$0xf]
        %v1331 = vld [vmem:[%s353 + $0x264] sm:$0xf]
        %v1332 = vld [vmem:[%s353 + $0x268] sm:$0xf]
        %v1333 = vld [vmem:[%s353 + $0x26c] sm:$0xf]
        %v1334 = vld [vmem:[%s353 + $0x270] sm:$0xf]
        %v1335 = vld [vmem:[%s353 + $0x274] sm:$0xf]
        %v1336 = vld [vmem:[%s353 + $0x278] sm:$0xf]
        %v1337 = vld [vmem:[%s353 + $0x27c] sm:$0xf]
        %v1338 = vld [vmem:[%s361] sm:$0x1]
        %v1340 = vlaneseq
        %v1341 = vshrl.u32 %v1340, 7
        %v1342 = vsub.s32 0, %v1341
        %v1343 = vrot.slane %v1338, %v1342
        %v1350 = vunpack.c.l.b16 %v1173
        %v1351 = vunpack.c.h.b16 %v1173
        %v1352 = vunpack.c.l.b16 %v1174
        %v1353 = vunpack.c.h.b16 %v1174
        %v1354 = vunpack.c.l.b16 %v1175
        %v1355 = vunpack.c.h.b16 %v1175
        %v1356 = vunpack.c.l.b16 %v1176
        %v1357 = vunpack.c.h.b16 %v1176
        %v1358 = vunpack.c.l.b16 %v1177
        %v1359 = vunpack.c.h.b16 %v1177
        %v1360 = vpack.c.b16 %v1350, %v1350
        %v1361 = vpack.c.b16 %v1351, %v1351
        %v1362 = vpack.c.b16 %v1352, %v1352
        %v1363 = vpack.c.b16 %v1353, %v1353
        %v1364 = vpack.c.b16 %v1354, %v1354
        %v1365 = vpack.c.b16 %v1355, %v1355
        %v1366 = vpack.c.b16 %v1356, %v1356
        %v1367 = vpack.c.b16 %v1357, %v1357
        %v1368 = vpack.c.b16 %v1358, %v1358
        %v1369 = vpack.c.b16 %v1359, %v1359
        %v1540 = vunpack.c.l.b16 %v1178
        %v1541 = vunpack.c.l.b16 %v1179
        %v1542 = vunpack.c.l.b16 %v1180
        %v1543 = vunpack.c.l.b16 %v1181
        %v1544 = vunpack.c.l.b16 %v1182
        %v1545 = vunpack.c.l.b16 %v1183
        %v1546 = vunpack.c.l.b16 %v1184
        %v1547 = vunpack.c.l.b16 %v1185
        %v1548 = vunpack.c.l.b16 %v1186
        %v1549 = vunpack.c.l.b16 %v1187
        %v1550 = vunpack.c.l.b16 %v1188
        %v1551 = vunpack.c.l.b16 %v1189
        %v1552 = vunpack.c.l.b16 %v1190
        %v1553 = vunpack.c.l.b16 %v1191
        %v1554 = vunpack.c.l.b16 %v1192
        %v1555 = vunpack.c.l.b16 %v1193
        %v1556 = vunpack.c.l.b16 %v1194
        %v1557 = vunpack.c.l.b16 %v1195
        %v1558 = vunpack.c.l.b16 %v1196
        %v1559 = vunpack.c.l.b16 %v1197
        %v1560 = vunpack.c.l.b16 %v1198
        %v1561 = vunpack.c.l.b16 %v1199
        %v1562 = vunpack.c.l.b16 %v1200
        %v1563 = vunpack.c.l.b16 %v1201
        %v1564 = vunpack.c.l.b16 %v1202
        %v1565 = vunpack.c.l.b16 %v1203
        %v1566 = vunpack.c.l.b16 %v1204
        %v1567 = vunpack.c.l.b16 %v1205
        %v1568 = vunpack.c.l.b16 %v1206
        %v1569 = vunpack.c.l.b16 %v1207
        %v1570 = vunpack.c.l.b16 %v1208
        %v1571 = vunpack.c.l.b16 %v1209
        %v1572 = vunpack.c.l.b16 %v1210
        %v1573 = vunpack.c.l.b16 %v1211
        %v1574 = vunpack.c.l.b16 %v1212
        %v1575 = vunpack.c.l.b16 %v1213
        %v1576 = vunpack.c.l.b16 %v1214
        %v1577 = vunpack.c.l.b16 %v1215
        %v1578 = vunpack.c.l.b16 %v1216
        %v1579 = vunpack.c.l.b16 %v1217
        %v1580 = vunpack.c.l.b16 %v1218
        %v1581 = vunpack.c.l.b16 %v1219
        %v1582 = vunpack.c.l.b16 %v1220
        %v1583 = vunpack.c.l.b16 %v1221
        %v1584 = vunpack.c.l.b16 %v1222
        %v1585 = vunpack.c.l.b16 %v1223
        %v1586 = vunpack.c.l.b16 %v1224
        %v1587 = vunpack.c.l.b16 %v1225
        %v1588 = vunpack.c.l.b16 %v1226
        %v1589 = vunpack.c.l.b16 %v1227
        %v1590 = vunpack.c.l.b16 %v1228
        %v1591 = vunpack.c.l.b16 %v1229
        %v1592 = vunpack.c.l.b16 %v1230
        %v1593 = vunpack.c.l.b16 %v1231
        %v1594 = vunpack.c.l.b16 %v1232
        %v1595 = vunpack.c.l.b16 %v1233
        %v1596 = vunpack.c.l.b16 %v1234
        %v1597 = vunpack.c.l.b16 %v1235
        %v1598 = vunpack.c.l.b16 %v1236
        %v1599 = vunpack.c.l.b16 %v1237
        %v1600 = vunpack.c.l.b16 %v1238
        %v1601 = vunpack.c.l.b16 %v1239
        %v1602 = vunpack.c.l.b16 %v1240
        %v1603 = vunpack.c.l.b16 %v1241
        %v1604 = vunpack.c.l.b16 %v1242
        %v1605 = vunpack.c.l.b16 %v1243
        %v1606 = vunpack.c.l.b16 %v1244
        %v1607 = vunpack.c.l.b16 %v1245
        %v1608 = vunpack.c.l.b16 %v1246
        %v1609 = vunpack.c.l.b16 %v1247
        %v1610 = vunpack.c.l.b16 %v1248
        %v1611 = vunpack.c.l.b16 %v1249
        %v1612 = vunpack.c.l.b16 %v1250
        %v1613 = vunpack.c.l.b16 %v1251
        %v1614 = vunpack.c.l.b16 %v1252
        %v1615 = vunpack.c.l.b16 %v1253
        %v1616 = vunpack.c.l.b16 %v1254
        %v1617 = vunpack.c.l.b16 %v1255
        %v1618 = vunpack.c.l.b16 %v1256
        %v1619 = vunpack.c.l.b16 %v1257
        %v1620 = vunpack.c.l.b16 %v1258
        %v1621 = vunpack.c.l.b16 %v1259
        %v1622 = vunpack.c.l.b16 %v1260
        %v1623 = vunpack.c.l.b16 %v1261
        %v1624 = vunpack.c.l.b16 %v1262
        %v1625 = vunpack.c.l.b16 %v1263
        %v1626 = vunpack.c.l.b16 %v1264
        %v1627 = vunpack.c.l.b16 %v1265
        %v1628 = vunpack.c.l.b16 %v1266
        %v1629 = vunpack.c.l.b16 %v1267
        %v1630 = vunpack.c.l.b16 %v1268
        %v1631 = vunpack.c.l.b16 %v1269
        %v1632 = vunpack.c.l.b16 %v1270
        %v1633 = vunpack.c.l.b16 %v1271
        %v1634 = vunpack.c.l.b16 %v1272
        %v1635 = vunpack.c.l.b16 %v1273
        %v1636 = vunpack.c.l.b16 %v1274
        %v1637 = vunpack.c.l.b16 %v1275
        %v1638 = vunpack.c.l.b16 %v1276
        %v1639 = vunpack.c.l.b16 %v1277
        %v1640 = vunpack.c.l.b16 %v1278
        %v1641 = vunpack.c.l.b16 %v1279
        %v1642 = vunpack.c.l.b16 %v1280
        %v1643 = vunpack.c.l.b16 %v1281
        %v1644 = vunpack.c.l.b16 %v1282
        %v1645 = vunpack.c.l.b16 %v1283
        %v1646 = vunpack.c.l.b16 %v1284
        %v1647 = vunpack.c.l.b16 %v1285
        %v1648 = vunpack.c.l.b16 %v1286
        %v1649 = vunpack.c.l.b16 %v1287
        %v1650 = vunpack.c.l.b16 %v1288
        %v1651 = vunpack.c.l.b16 %v1289
        %v1652 = vunpack.c.l.b16 %v1290
        %v1653 = vunpack.c.l.b16 %v1291
        %v1654 = vunpack.c.l.b16 %v1292
        %v1655 = vunpack.c.l.b16 %v1293
        %v1656 = vunpack.c.l.b16 %v1294
        %v1657 = vunpack.c.l.b16 %v1295
        %v1658 = vunpack.c.l.b16 %v1296
        %v1659 = vunpack.c.l.b16 %v1297
        %v1660 = vunpack.c.l.b16 %v1298
        %v1661 = vunpack.c.l.b16 %v1299
        %v1662 = vunpack.c.l.b16 %v1300
        %v1663 = vunpack.c.l.b16 %v1301
        %v1664 = vunpack.c.l.b16 %v1302
        %v1665 = vunpack.c.l.b16 %v1303
        %v1666 = vunpack.c.l.b16 %v1304
        %v1667 = vunpack.c.l.b16 %v1305
        %v1668 = vunpack.c.l.b16 %v1306
        %v1669 = vunpack.c.l.b16 %v1307
        %v1670 = vunpack.c.l.b16 %v1308
        %v1671 = vunpack.c.l.b16 %v1309
        %v1672 = vunpack.c.l.b16 %v1310
        %v1673 = vunpack.c.l.b16 %v1311
        %v1674 = vunpack.c.l.b16 %v1312
        %v1675 = vunpack.c.l.b16 %v1313
        %v1676 = vunpack.c.l.b16 %v1314
        %v1677 = vunpack.c.l.b16 %v1315
        %v1678 = vunpack.c.l.b16 %v1316
        %v1679 = vunpack.c.l.b16 %v1317
        %v1680 = vunpack.c.l.b16 %v1318
        %v1681 = vunpack.c.l.b16 %v1319
        %v1682 = vunpack.c.l.b16 %v1320
        %v1683 = vunpack.c.l.b16 %v1321
        %v1684 = vunpack.c.l.b16 %v1322
        %v1685 = vunpack.c.l.b16 %v1323
        %v1686 = vunpack.c.l.b16 %v1324
        %v1687 = vunpack.c.l.b16 %v1325
        %v1688 = vunpack.c.l.b16 %v1326
        %v1689 = vunpack.c.l.b16 %v1327
        %v1690 = vunpack.c.l.b16 %v1328
        %v1691 = vunpack.c.l.b16 %v1329
        %v1692 = vunpack.c.l.b16 %v1330
        %v1693 = vunpack.c.l.b16 %v1331
        %v1694 = vunpack.c.l.b16 %v1332
        %v1695 = vunpack.c.l.b16 %v1333
        %v1696 = vunpack.c.l.b16 %v1334
        %v1697 = vunpack.c.l.b16 %v1335
        %v1698 = vunpack.c.l.b16 %v1336
        %v1699 = vunpack.c.l.b16 %v1337
        %v1700 = vpack.c.b16 %v1541, %v1540
        %v1701 = vpack.c.b16 %v1543, %v1542
        %v1702 = vpack.c.b16 %v1545, %v1544
        %v1703 = vpack.c.b16 %v1547, %v1546
        %v1704 = vpack.c.b16 %v1549, %v1548
        %v1705 = vpack.c.b16 %v1551, %v1550
        %v1706 = vpack.c.b16 %v1553, %v1552
        %v1707 = vpack.c.b16 %v1555, %v1554
        %v1708 = vpack.c.b16 %v1557, %v1556
        %v1709 = vpack.c.b16 %v1559, %v1558
        %v1710 = vpack.c.b16 %v1561, %v1560
        %v1711 = vpack.c.b16 %v1563, %v1562
        %v1712 = vpack.c.b16 %v1565, %v1564
        %v1713 = vpack.c.b16 %v1567, %v1566
        %v1714 = vpack.c.b16 %v1569, %v1568
        %v1715 = vpack.c.b16 %v1571, %v1570
        %v1716 = vpack.c.b16 %v1573, %v1572
        %v1717 = vpack.c.b16 %v1575, %v1574
        %v1718 = vpack.c.b16 %v1577, %v1576
        %v1719 = vpack.c.b16 %v1579, %v1578
        %v1720 = vpack.c.b16 %v1581, %v1580
        %v1721 = vpack.c.b16 %v1583, %v1582
        %v1722 = vpack.c.b16 %v1585, %v1584
        %v1723 = vpack.c.b16 %v1587, %v1586
        %v1724 = vpack.c.b16 %v1589, %v1588
        %v1725 = vpack.c.b16 %v1591, %v1590
        %v1726 = vpack.c.b16 %v1593, %v1592
        %v1727 = vpack.c.b16 %v1595, %v1594
        %v1728 = vpack.c.b16 %v1597, %v1596
        %v1729 = vpack.c.b16 %v1599, %v1598
        %v1730 = vpack.c.b16 %v1601, %v1600
        %v1731 = vpack.c.b16 %v1603, %v1602
        %v1732 = vpack.c.b16 %v1605, %v1604
        %v1733 = vpack.c.b16 %v1607, %v1606
        %v1734 = vpack.c.b16 %v1609, %v1608
        %v1735 = vpack.c.b16 %v1611, %v1610
        %v1736 = vpack.c.b16 %v1613, %v1612
        %v1737 = vpack.c.b16 %v1615, %v1614
        %v1738 = vpack.c.b16 %v1617, %v1616
        %v1739 = vpack.c.b16 %v1619, %v1618
        %v1740 = vpack.c.b16 %v1621, %v1620
        %v1741 = vpack.c.b16 %v1623, %v1622
        %v1742 = vpack.c.b16 %v1625, %v1624
        %v1743 = vpack.c.b16 %v1627, %v1626
        %v1744 = vpack.c.b16 %v1629, %v1628
        %v1745 = vpack.c.b16 %v1631, %v1630
        %v1746 = vpack.c.b16 %v1633, %v1632
        %v1747 = vpack.c.b16 %v1635, %v1634
        %v1748 = vpack.c.b16 %v1637, %v1636
        %v1749 = vpack.c.b16 %v1639, %v1638
        %v1750 = vpack.c.b16 %v1641, %v1640
        %v1751 = vpack.c.b16 %v1643, %v1642
        %v1752 = vpack.c.b16 %v1645, %v1644
        %v1753 = vpack.c.b16 %v1647, %v1646
        %v1754 = vpack.c.b16 %v1649, %v1648
        %v1755 = vpack.c.b16 %v1651, %v1650
        %v1756 = vpack.c.b16 %v1653, %v1652
        %v1757 = vpack.c.b16 %v1655, %v1654
        %v1758 = vpack.c.b16 %v1657, %v1656
        %v1759 = vpack.c.b16 %v1659, %v1658
        %v1760 = vpack.c.b16 %v1661, %v1660
        %v1761 = vpack.c.b16 %v1663, %v1662
        %v1762 = vpack.c.b16 %v1665, %v1664
        %v1763 = vpack.c.b16 %v1667, %v1666
        %v1764 = vpack.c.b16 %v1669, %v1668
        %v1765 = vpack.c.b16 %v1671, %v1670
        %v1766 = vpack.c.b16 %v1673, %v1672
        %v1767 = vpack.c.b16 %v1675, %v1674
        %v1768 = vpack.c.b16 %v1677, %v1676
        %v1769 = vpack.c.b16 %v1679, %v1678
        %v1770 = vpack.c.b16 %v1681, %v1680
        %v1771 = vpack.c.b16 %v1683, %v1682
        %v1772 = vpack.c.b16 %v1685, %v1684
        %v1773 = vpack.c.b16 %v1687, %v1686
        %v1774 = vpack.c.b16 %v1689, %v1688
        %v1775 = vpack.c.b16 %v1691, %v1690
        %v1776 = vpack.c.b16 %v1693, %v1692
        %v1777 = vpack.c.b16 %v1695, %v1694
        %v1778 = vpack.c.b16 %v1697, %v1696
        %v1779 = vpack.c.b16 %v1699, %v1698
        %1860 = vmatprep.subr.bf16.mxu0 0
        %1861 = vmatpush1.bf16.msra.mxu0 %v1700
        %1862 = vmatprep.subr.bf16.mxu0 0
        %1863 = vmatpush1.bf16.msra.mxu0 %v1701
        %1864 = vmatprep.subr.bf16.mxu0 0
        %1865 = vmatpush1.bf16.msra.mxu0 %v1702
        %1866 = vmatprep.subr.bf16.mxu0 0
        %1867 = vmatpush1.bf16.msra.mxu0 %v1703
        %1868 = vmatprep.subr.bf16.mxu0 0
        %1869 = vmatpush1.bf16.msra.mxu0 %v1704
        %1870 = vmatprep.subr.bf16.mxu0 0
        %1871 = vmatpush1.bf16.msra.mxu0 %v1705
        %1872 = vmatprep.subr.bf16.mxu0 0
        %1873 = vmatpush1.bf16.msra.mxu0 %v1706
        %1874 = vmatprep.subr.bf16.mxu0 0
        %1875 = vmatpush1.bf16.msra.mxu0 %v1707
        %1876 = vmatprep.subr.bf16.mxu0 0
        %1877 = vmatpush1.bf16.msra.mxu0 %v1708
        %1878 = vmatprep.subr.bf16.mxu0 0
        %1879 = vmatpush1.bf16.msra.mxu0 %v1709
        %1880 = vmatprep.subr.bf16.mxu0 0
        %1881 = vmatpush1.bf16.msra.mxu0 %v1710
        %1882 = vmatprep.subr.bf16.mxu0 0
        %1883 = vmatpush1.bf16.msra.mxu0 %v1711
        %1884 = vmatprep.subr.bf16.mxu0 0
        %1885 = vmatpush1.bf16.msra.mxu0 %v1712
        %1886 = vmatprep.subr.bf16.mxu0 0
        %1887 = vmatpush1.bf16.msra.mxu0 %v1713
        %1888 = vmatprep.subr.bf16.mxu0 0
        %1889 = vmatpush1.bf16.msra.mxu0 %v1714
        %1890 = vmatprep.subr.bf16.mxu0 0
        %1891 = vmatpush1.bf16.msra.mxu0 %v1715
        %1892 = vmatprep.mubr.bf16.mxu0 %v1361
        %1893 = vmatmul.mubr.bf16.gmra.mrb[0].mxu0 %v1360
        %v1894 = vpop.f32.mrb[0].mxu0
        %v1895 = vadd.f32 %v1343, %v1894
        %v1896 = vpop.f32.mrb[0].mxu0
        %v1897 = vpop.f32.mrb[0].mxu0
        %v1898 = vpop.f32.mrb[0].mxu0
        %1899 = vdwg.mxu0
        %1900 = vmatprep.subr.bf16.mxu0 0
        %1901 = vmatpush1.bf16.msra.mxu0 %v1716
        %1902 = vmatprep.subr.bf16.mxu0 0
        %1903 = vmatpush1.bf16.msra.mxu0 %v1717
        %1904 = vmatprep.subr.bf16.mxu0 0
        %1905 = vmatpush1.bf16.msra.mxu0 %v1718
        %1906 = vmatprep.subr.bf16.mxu0 0
        %1907 = vmatpush1.bf16.msra.mxu0 %v1719
        %1908 = vmatprep.subr.bf16.mxu0 0
        %1909 = vmatpush1.bf16.msra.mxu0 %v1720
        %1910 = vmatprep.subr.bf16.mxu0 0
        %1911 = vmatpush1.bf16.msra.mxu0 %v1721
        %1912 = vmatprep.subr.bf16.mxu0 0
        %1913 = vmatpush1.bf16.msra.mxu0 %v1722
        %1914 = vmatprep.subr.bf16.mxu0 0
        %1915 = vmatpush1.bf16.msra.mxu0 %v1723
        %1916 = vmatprep.subr.bf16.mxu0 0
        %1917 = vmatpush1.bf16.msra.mxu0 %v1724
        %1918 = vmatprep.subr.bf16.mxu0 0
        %1919 = vmatpush1.bf16.msra.mxu0 %v1725
        %1920 = vmatprep.subr.bf16.mxu0 0
        %1921 = vmatpush1.bf16.msra.mxu0 %v1726
        %1922 = vmatprep.subr.bf16.mxu0 0
        %1923 = vmatpush1.bf16.msra.mxu0 %v1727
        %1924 = vmatprep.subr.bf16.mxu0 0
        %1925 = vmatpush1.bf16.msra.mxu0 %v1728
        %1926 = vmatprep.subr.bf16.mxu0 0
        %1927 = vmatpush1.bf16.msra.mxu0 %v1729
        %1928 = vmatprep.subr.bf16.mxu0 0
        %1929 = vmatpush1.bf16.msra.mxu0 %v1730
        %1930 = vmatprep.subr.bf16.mxu0 0
        %1931 = vmatpush1.bf16.msra.mxu0 %v1731
        %1932 = vmatprep.mubr.bf16.mxu0 %v1363
        %1933 = vmatmul.mubr.bf16.gmra.mrb[0].mxu0 %v1362
        %v1934 = vpop.f32.mrb[0].mxu0
        %v1935 = vadd.f32 %v1895, %v1934
        %v1936 = vpop.f32.mrb[0].mxu0
        %v1937 = vpop.f32.mrb[0].mxu0
        %v1938 = vpop.f32.mrb[0].mxu0
        %1939 = vdwg.mxu0
        %1940 = vmatprep.subr.bf16.mxu0 0
        %1941 = vmatpush1.bf16.msra.mxu0 %v1732
        %1942 = vmatprep.subr.bf16.mxu0 0
        %1943 = vmatpush1.bf16.msra.mxu0 %v1733
        %1944 = vmatprep.subr.bf16.mxu0 0
        %1945 = vmatpush1.bf16.msra.mxu0 %v1734
        %1946 = vmatprep.subr.bf16.mxu0 0
        %1947 = vmatpush1.bf16.msra.mxu0 %v1735
        %1948 = vmatprep.subr.bf16.mxu0 0
        %1949 = vmatpush1.bf16.msra.mxu0 %v1736
        %1950 = vmatprep.subr.bf16.mxu0 0
        %1951 = vmatpush1.bf16.msra.mxu0 %v1737
        %1952 = vmatprep.subr.bf16.mxu0 0
        %1953 = vmatpush1.bf16.msra.mxu0 %v1738
        %1954 = vmatprep.subr.bf16.mxu0 0
        %1955 = vmatpush1.bf16.msra.mxu0 %v1739
        %1956 = vmatprep.subr.bf16.mxu0 0
        %1957 = vmatpush1.bf16.msra.mxu0 %v1740
        %1958 = vmatprep.subr.bf16.mxu0 0
        %1959 = vmatpush1.bf16.msra.mxu0 %v1741
        %1960 = vmatprep.subr.bf16.mxu0 0
        %1961 = vmatpush1.bf16.msra.mxu0 %v1742
        %1962 = vmatprep.subr.bf16.mxu0 0
        %1963 = vmatpush1.bf16.msra.mxu0 %v1743
        %1964 = vmatprep.subr.bf16.mxu0 0
        %1965 = vmatpush1.bf16.msra.mxu0 %v1744
        %1966 = vmatprep.subr.bf16.mxu0 0
        %1967 = vmatpush1.bf16.msra.mxu0 %v1745
        %1968 = vmatprep.subr.bf16.mxu0 0
        %1969 = vmatpush1.bf16.msra.mxu0 %v1746
        %1970 = vmatprep.subr.bf16.mxu0 0
        %1971 = vmatpush1.bf16.msra.mxu0 %v1747
        %1972 = vmatprep.mubr.bf16.mxu0 %v1365
        %1973 = vmatmul.mubr.bf16.gmra.mrb[0].mxu0 %v1364
        %v1974 = vpop.f32.mrb[0].mxu0
        %v1975 = vadd.f32 %v1935, %v1974
        %v1976 = vpop.f32.mrb[0].mxu0
        %v1977 = vpop.f32.mrb[0].mxu0
        %v1978 = vpop.f32.mrb[0].mxu0
        %1979 = vdwg.mxu0
        %1980 = vmatprep.subr.bf16.mxu0 0
        %1981 = vmatpush1.bf16.msra.mxu0 %v1748
        %1982 = vmatprep.subr.bf16.mxu0 0
        %1983 = vmatpush1.bf16.msra.mxu0 %v1749
        %1984 = vmatprep.subr.bf16.mxu0 0
        %1985 = vmatpush1.bf16.msra.mxu0 %v1750
        %1986 = vmatprep.subr.bf16.mxu0 0
        %1987 = vmatpush1.bf16.msra.mxu0 %v1751
        %1988 = vmatprep.subr.bf16.mxu0 0
        %1989 = vmatpush1.bf16.msra.mxu0 %v1752
        %1990 = vmatprep.subr.bf16.mxu0 0
        %1991 = vmatpush1.bf16.msra.mxu0 %v1753
        %1992 = vmatprep.subr.bf16.mxu0 0
        %1993 = vmatpush1.bf16.msra.mxu0 %v1754
        %1994 = vmatprep.subr.bf16.mxu0 0
        %1995 = vmatpush1.bf16.msra.mxu0 %v1755
        %1996 = vmatprep.subr.bf16.mxu0 0
        %1997 = vmatpush1.bf16.msra.mxu0 %v1756
        %1998 = vmatprep.subr.bf16.mxu0 0
        %1999 = vmatpush1.bf16.msra.mxu0 %v1757
        %2000 = vmatprep.subr.bf16.mxu0 0
        %2001 = vmatpush1.bf16.msra.mxu0 %v1758
        %2002 = vmatprep.subr.bf16.mxu0 0
        %2003 = vmatpush1.bf16.msra.mxu0 %v1759
        %2004 = vmatprep.subr.bf16.mxu0 0
        %2005 = vmatpush1.bf16.msra.mxu0 %v1760
        %2006 = vmatprep.subr.bf16.mxu0 0
        %2007 = vmatpush1.bf16.msra.mxu0 %v1761
        %2008 = vmatprep.subr.bf16.mxu0 0
        %2009 = vmatpush1.bf16.msra.mxu0 %v1762
        %2010 = vmatprep.subr.bf16.mxu0 0
        %2011 = vmatpush1.bf16.msra.mxu0 %v1763
        %2012 = vmatprep.mubr.bf16.mxu0 %v1367
        %2013 = vmatmul.mubr.bf16.gmra.mrb[0].mxu0 %v1366
        %v2014 = vpop.f32.mrb[0].mxu0
        %v2015 = vadd.f32 %v1975, %v2014
        %v2016 = vpop.f32.mrb[0].mxu0
        %v2017 = vpop.f32.mrb[0].mxu0
        %v2018 = vpop.f32.mrb[0].mxu0
        %2019 = vdwg.mxu0
        %2020 = vmatprep.subr.bf16.mxu0 0
        %2021 = vmatpush1.bf16.msra.mxu0 %v1764
        %2022 = vmatprep.subr.bf16.mxu0 0
        %2023 = vmatpush1.bf16.msra.mxu0 %v1765
        %2024 = vmatprep.subr.bf16.mxu0 0
        %2025 = vmatpush1.bf16.msra.mxu0 %v1766
        %2026 = vmatprep.subr.bf16.mxu0 0
        %2027 = vmatpush1.bf16.msra.mxu0 %v1767
        %2028 = vmatprep.subr.bf16.mxu0 0
        %2029 = vmatpush1.bf16.msra.mxu0 %v1768
        %2030 = vmatprep.subr.bf16.mxu0 0
        %2031 = vmatpush1.bf16.msra.mxu0 %v1769
        %2032 = vmatprep.subr.bf16.mxu0 0
        %2033 = vmatpush1.bf16.msra.mxu0 %v1770
        %2034 = vmatprep.subr.bf16.mxu0 0
        %2035 = vmatpush1.bf16.msra.mxu0 %v1771
        %2036 = vmatprep.subr.bf16.mxu0 0
        %2037 = vmatpush1.bf16.msra.mxu0 %v1772
        %2038 = vmatprep.subr.bf16.mxu0 0
        %2039 = vmatpush1.bf16.msra.mxu0 %v1773
        %2040 = vmatprep.subr.bf16.mxu0 0
        %2041 = vmatpush1.bf16.msra.mxu0 %v1774
        %2042 = vmatprep.subr.bf16.mxu0 0
        %2043 = vmatpush1.bf16.msra.mxu0 %v1775
        %2044 = vmatprep.subr.bf16.mxu0 0
        %2045 = vmatpush1.bf16.msra.mxu0 %v1776
        %2046 = vmatprep.subr.bf16.mxu0 0
        %2047 = vmatpush1.bf16.msra.mxu0 %v1777
        %2048 = vmatprep.subr.bf16.mxu0 0
        %2049 = vmatpush1.bf16.msra.mxu0 %v1778
        %2050 = vmatprep.subr.bf16.mxu0 0
        %2051 = vmatpush1.bf16.msra.mxu0 %v1779
        %2052 = vmatprep.mubr.bf16.mxu0 %v1369
        %2053 = vmatmul.mubr.bf16.gmra.mrb[0].mxu0 %v1368
        %v2054 = vpop.f32.mrb[0].mxu0
        %v2055 = vadd.f32 %v2015, %v2054
        %v2056 = vpop.f32.mrb[0].mxu0
        %v2057 = vpop.f32.mrb[0].mxu0
        %v2058 = vpop.f32.mrb[0].mxu0
        %2059 = vdwg.mxu0
        %v2060 = vmax.f32 %v2055, 0.0
        %v2061 = vld [vmem:[#allocation3] sm:$0xff]
        %v2062 = vld [vmem:[#allocation3 + $0x8] sm:$0xff]
        %v2063 = vld [vmem:[#allocation3 + $0x10] sm:$0xff]
        %v2064 = vld [vmem:[#allocation3 + $0x18] sm:$0xff]
        %v2065 = vld [vmem:[#allocation3 + $0x20] sm:$0xff]
        %v2066 = vld [vmem:[#allocation3 + $0x28] sm:$0xff]
        %v2067 = vld [vmem:[#allocation3 + $0x30] sm:$0xff]
        %v2068 = vpack.c.bf16 %v2060, %v2060
        %v2069 = vld [vmem:[%s370] sm:$0xff]
        %v2070 = vld [vmem:[%s370 + $0x8] sm:$0xff]
        %v2071 = vld [vmem:[%s370 + $0x10] sm:$0xff]
        %v2072 = vld [vmem:[%s370 + $0x18] sm:$0xf]
        %v2073 = vld [vmem:[%s370 + $0x1c] sm:$0xff]
        %v2074 = vld [vmem:[%s370 + $0x24] sm:$0xff]
        %v2075 = vld [vmem:[%s370 + $0x2c] sm:$0xff]
        %v2076 = vld [vmem:[%s370 + $0x34] sm:$0xf]
        %v2077 = vld [vmem:[%s370 + $0x38] sm:$0xff]
        %v2078 = vld [vmem:[%s370 + $0x40] sm:$0xff]
        %v2079 = vld [vmem:[%s370 + $0x48] sm:$0xff]
        %v2080 = vld [vmem:[%s370 + $0x50] sm:$0xf]
        %v2081 = vld [vmem:[%s370 + $0x54] sm:$0xff]
        %v2082 = vld [vmem:[%s370 + $0x5c] sm:$0xff]
        %v2083 = vld [vmem:[%s370 + $0x64] sm:$0xff]
        %v2084 = vld [vmem:[%s370 + $0x6c] sm:$0xf]
        %v2085 = vld [vmem:[%s370 + $0x70] sm:$0xff]
        %v2086 = vld [vmem:[%s370 + $0x78] sm:$0xff]
        %v2087 = vld [vmem:[%s370 + $0x80] sm:$0xff]
        %v2088 = vld [vmem:[%s370 + $0x88] sm:$0xf]
        %v2089 = vld [vmem:[%s370 + $0x8c] sm:$0xff]
        %v2090 = vld [vmem:[%s370 + $0x94] sm:$0xff]
        %v2091 = vld [vmem:[%s370 + $0x9c] sm:$0xff]
        %v2092 = vld [vmem:[%s370 + $0xa4] sm:$0xf]
        %v2093 = vld [vmem:[%s370 + $0xa8] sm:$0xff]
        %v2094 = vld [vmem:[%s370 + $0xb0] sm:$0xff]
        %v2095 = vld [vmem:[%s370 + $0xb8] sm:$0xff]
        %v2096 = vld [vmem:[%s370 + $0xc0] sm:$0xf]
        %v2097 = vld [vmem:[%s370 + $0xc4] sm:$0xff]
        %v2098 = vld [vmem:[%s370 + $0xcc] sm:$0xff]
        %v2099 = vld [vmem:[%s370 + $0xd4] sm:$0xff]
        %v2100 = vld [vmem:[%s370 + $0xdc] sm:$0xf]
        %v2101 = vld [vmem:[%s370 + $0xe0] sm:$0xff]
        %v2102 = vld [vmem:[%s370 + $0xe8] sm:$0xff]
        %v2103 = vld [vmem:[%s370 + $0xf0] sm:$0xff]
        %v2104 = vld [vmem:[%s370 + $0xf8] sm:$0xf]
        %v2105 = vld [vmem:[%s370 + $0xfc] sm:$0xff]
        %v2106 = vld [vmem:[%s370 + $0x104] sm:$0xff]
        %v2107 = vld [vmem:[%s370 + $0x10c] sm:$0xff]
        %v2108 = vld [vmem:[%s370 + $0x114] sm:$0xf]
        %v2109 = vld [vmem:[%s370 + $0x118] sm:$0xff]
        %v2110 = vld [vmem:[%s370 + $0x120] sm:$0xff]
        %v2111 = vld [vmem:[%s370 + $0x128] sm:$0xff]
        %v2112 = vld [vmem:[%s370 + $0x130] sm:$0xf]
        %v2113 = vld [vmem:[%s370 + $0x134] sm:$0xff]
        %v2114 = vld [vmem:[%s370 + $0x13c] sm:$0xff]
        %v2115 = vld [vmem:[%s370 + $0x144] sm:$0xff]
        %v2116 = vld [vmem:[%s370 + $0x14c] sm:$0xf]
        %v2117 = vld [vmem:[%s370 + $0x150] sm:$0xff]
        %v2118 = vld [vmem:[%s370 + $0x158] sm:$0xff]
        %v2119 = vld [vmem:[%s370 + $0x160] sm:$0xff]
        %v2120 = vld [vmem:[%s370 + $0x168] sm:$0xf]
        %v2121 = vld [vmem:[%s370 + $0x16c] sm:$0xff]
        %v2122 = vld [vmem:[%s370 + $0x174] sm:$0xff]
        %v2123 = vld [vmem:[%s370 + $0x17c] sm:$0xff]
        %v2124 = vld [vmem:[%s370 + $0x184] sm:$0xf]
        %v2125 = vld [vmem:[%s370 + $0x188] sm:$0xff]
        %v2126 = vld [vmem:[%s370 + $0x190] sm:$0xff]
        %v2127 = vld [vmem:[%s370 + $0x198] sm:$0xff]
        %v2128 = vld [vmem:[%s370 + $0x1a0] sm:$0xf]
        %v2129 = vld [vmem:[%s370 + $0x1a4] sm:$0xff]
        %v2130 = vld [vmem:[%s370 + $0x1ac] sm:$0xff]
        %v2131 = vld [vmem:[%s370 + $0x1b4] sm:$0xff]
        %v2132 = vld [vmem:[%s370 + $0x1bc] sm:$0xf]
        %v2197 = vunpack.c.l.b16 %v2069
        %v2198 = vunpack.c.h.b16 %v2069
        %v2199 = vunpack.c.l.b16 %v2070
        %v2200 = vunpack.c.h.b16 %v2070
        %v2201 = vunpack.c.l.b16 %v2071
        %v2202 = vunpack.c.h.b16 %v2071
        %v2203 = vunpack.c.l.b16 %v2072
        %v2204 = vunpack.c.l.b16 %v2073
        %v2205 = vunpack.c.h.b16 %v2073
        %v2206 = vunpack.c.l.b16 %v2074
        %v2207 = vunpack.c.h.b16 %v2074
        %v2208 = vunpack.c.l.b16 %v2075
        %v2209 = vunpack.c.h.b16 %v2075
        %v2210 = vunpack.c.l.b16 %v2076
        %v2211 = vunpack.c.l.b16 %v2077
        %v2212 = vunpack.c.h.b16 %v2077
        %v2213 = vunpack.c.l.b16 %v2078
        %v2214 = vunpack.c.h.b16 %v2078
        %v2215 = vunpack.c.l.b16 %v2079
        %v2216 = vunpack.c.h.b16 %v2079
        %v2217 = vunpack.c.l.b16 %v2080
        %v2218 = vunpack.c.l.b16 %v2081
        %v2219 = vunpack.c.h.b16 %v2081
        %v2220 = vunpack.c.l.b16 %v2082
        %v2221 = vunpack.c.h.b16 %v2082
        %v2222 = vunpack.c.l.b16 %v2083
        %v2223 = vunpack.c.h.b16 %v2083
        %v2224 = vunpack.c.l.b16 %v2084
        %v2225 = vunpack.c.l.b16 %v2085
        %v2226 = vunpack.c.h.b16 %v2085
        %v2227 = vunpack.c.l.b16 %v2086
        %v2228 = vunpack.c.h.b16 %v2086
        %v2229 = vunpack.c.l.b16 %v2087
        %v2230 = vunpack.c.h.b16 %v2087
        %v2231 = vunpack.c.l.b16 %v2088
        %v2232 = vunpack.c.l.b16 %v2089
        %v2233 = vunpack.c.h.b16 %v2089
        %v2234 = vunpack.c.l.b16 %v2090
        %v2235 = vunpack.c.h.b16 %v2090
        %v2236 = vunpack.c.l.b16 %v2091
        %v2237 = vunpack.c.h.b16 %v2091
        %v2238 = vunpack.c.l.b16 %v2092
        %v2239 = vunpack.c.l.b16 %v2093
        %v2240 = vunpack.c.h.b16 %v2093
        %v2241 = vunpack.c.l.b16 %v2094
        %v2242 = vunpack.c.h.b16 %v2094
        %v2243 = vunpack.c.l.b16 %v2095
        %v2244 = vunpack.c.h.b16 %v2095
        %v2245 = vunpack.c.l.b16 %v2096
        %v2246 = vunpack.c.l.b16 %v2097
        %v2247 = vunpack.c.h.b16 %v2097
        %v2248 = vunpack.c.l.b16 %v2098
        %v2249 = vunpack.c.h.b16 %v2098
        %v2250 = vunpack.c.l.b16 %v2099
        %v2251 = vunpack.c.h.b16 %v2099
        %v2252 = vunpack.c.l.b16 %v2100
        %v2253 = vunpack.c.l.b16 %v2101
        %v2254 = vunpack.c.h.b16 %v2101
        %v2255 = vunpack.c.l.b16 %v2102
        %v2256 = vunpack.c.h.b16 %v2102
        %v2257 = vunpack.c.l.b16 %v2103
        %v2258 = vunpack.c.h.b16 %v2103
        %v2259 = vunpack.c.l.b16 %v2104
        %v2260 = vunpack.c.l.b16 %v2105
        %v2261 = vunpack.c.h.b16 %v2105
        %v2262 = vunpack.c.l.b16 %v2106
        %v2263 = vunpack.c.h.b16 %v2106
        %v2264 = vunpack.c.l.b16 %v2107
        %v2265 = vunpack.c.h.b16 %v2107
        %v2266 = vunpack.c.l.b16 %v2108
        %v2267 = vunpack.c.l.b16 %v2109
        %v2268 = vunpack.c.h.b16 %v2109
        %v2269 = vunpack.c.l.b16 %v2110
        %v2270 = vunpack.c.h.b16 %v2110
        %v2271 = vunpack.c.l.b16 %v2111
        %v2272 = vunpack.c.h.b16 %v2111
        %v2273 = vunpack.c.l.b16 %v2112
        %v2274 = vunpack.c.l.b16 %v2113
        %v2275 = vunpack.c.h.b16 %v2113
        %v2276 = vunpack.c.l.b16 %v2114
        %v2277 = vunpack.c.h.b16 %v2114
        %v2278 = vunpack.c.l.b16 %v2115
        %v2279 = vunpack.c.h.b16 %v2115
        %v2280 = vunpack.c.l.b16 %v2116
        %v2281 = vunpack.c.l.b16 %v2117
        %v2282 = vunpack.c.h.b16 %v2117
        %v2283 = vunpack.c.l.b16 %v2118
        %v2284 = vunpack.c.h.b16 %v2118
        %v2285 = vunpack.c.l.b16 %v2119
        %v2286 = vunpack.c.h.b16 %v2119
        %v2287 = vunpack.c.l.b16 %v2120
        %v2288 = vunpack.c.l.b16 %v2121
        %v2289 = vunpack.c.h.b16 %v2121
        %v2290 = vunpack.c.l.b16 %v2122
        %v2291 = vunpack.c.h.b16 %v2122
        %v2292 = vunpack.c.l.b16 %v2123
        %v2293 = vunpack.c.h.b16 %v2123
        %v2294 = vunpack.c.l.b16 %v2124
        %v2295 = vunpack.c.l.b16 %v2125
        %v2296 = vunpack.c.h.b16 %v2125
        %v2297 = vunpack.c.l.b16 %v2126
        %v2298 = vunpack.c.h.b16 %v2126
        %v2299 = vunpack.c.l.b16 %v2127
        %v2300 = vunpack.c.h.b16 %v2127
        %v2301 = vunpack.c.l.b16 %v2128
        %v2302 = vunpack.c.l.b16 %v2129
        %v2303 = vunpack.c.h.b16 %v2129
        %v2304 = vunpack.c.l.b16 %v2130
        %v2305 = vunpack.c.h.b16 %v2130
        %v2306 = vunpack.c.l.b16 %v2131
        %v2307 = vunpack.c.h.b16 %v2131
        %v2308 = vunpack.c.l.b16 %v2132
        %v2309 = vpack.c.b16 %v2204, %v2197
        %v2310 = vpack.c.b16 %v2205, %v2198
        %v2311 = vpack.c.b16 %v2206, %v2199
        %v2312 = vpack.c.b16 %v2207, %v2200
        %v2313 = vpack.c.b16 %v2208, %v2201
        %v2314 = vpack.c.b16 %v2209, %v2202
        %v2315 = vpack.c.b16 %v2210, %v2203
        %v2316 = vpack.c.b16 %v2218, %v2211
        %v2317 = vpack.c.b16 %v2219, %v2212
        %v2318 = vpack.c.b16 %v2220, %v2213
        %v2319 = vpack.c.b16 %v2221, %v2214
        %v2320 = vpack.c.b16 %v2222, %v2215
        %v2321 = vpack.c.b16 %v2223, %v2216
        %v2322 = vpack.c.b16 %v2224, %v2217
        %v2323 = vpack.c.b16 %v2232, %v2225
        %v2324 = vpack.c.b16 %v2233, %v2226
        %v2325 = vpack.c.b16 %v2234, %v2227
        %v2326 = vpack.c.b16 %v2235, %v2228
        %v2327 = vpack.c.b16 %v2236, %v2229
        %v2328 = vpack.c.b16 %v2237, %v2230
        %v2329 = vpack.c.b16 %v2238, %v2231
        %v2330 = vpack.c.b16 %v2246, %v2239
        %v2331 = vpack.c.b16 %v2247, %v2240
        %v2332 = vpack.c.b16 %v2248, %v2241
        %v2333 = vpack.c.b16 %v2249, %v2242
        %v2334 = vpack.c.b16 %v2250, %v2243
        %v2335 = vpack.c.b16 %v2251, %v2244
        %v2336 = vpack.c.b16 %v2252, %v2245
        %v2337 = vpack.c.b16 %v2260, %v2253
        %v2338 = vpack.c.b16 %v2261, %v2254
        %v2339 = vpack.c.b16 %v2262, %v2255
        %v2340 = vpack.c.b16 %v2263, %v2256
        %v2341 = vpack.c.b16 %v2264, %v2257
        %v2342 = vpack.c.b16 %v2265, %v2258
        %v2343 = vpack.c.b16 %v2266, %v2259
        %v2344 = vpack.c.b16 %v2274, %v2267
        %v2345 = vpack.c.b16 %v2275, %v2268
        %v2346 = vpack.c.b16 %v2276, %v2269
        %v2347 = vpack.c.b16 %v2277, %v2270
        %v2348 = vpack.c.b16 %v2278, %v2271
        %v2349 = vpack.c.b16 %v2279, %v2272
        %v2350 = vpack.c.b16 %v2280, %v2273
        %v2351 = vpack.c.b16 %v2288, %v2281
        %v2352 = vpack.c.b16 %v2289, %v2282
        %v2353 = vpack.c.b16 %v2290, %v2283
        %v2354 = vpack.c.b16 %v2291, %v2284
        %v2355 = vpack.c.b16 %v2292, %v2285
        %v2356 = vpack.c.b16 %v2293, %v2286
        %v2357 = vpack.c.b16 %v2294, %v2287
        %v2358 = vpack.c.b16 %v2302, %v2295
        %v2359 = vpack.c.b16 %v2303, %v2296
        %v2360 = vpack.c.b16 %v2304, %v2297
        %v2361 = vpack.c.b16 %v2305, %v2298
        %v2362 = vpack.c.b16 %v2306, %v2299
        %v2363 = vpack.c.b16 %v2307, %v2300
        %v2364 = vpack.c.b16 %v2308, %v2301
        %2421 = vmatprep.subr.bf16.mxu0 %v2310
        %2422 = vmatpush1.bf16.msra.mxu0 %v2309
        %2423 = vmatprep.subr.bf16.mxu0 %v2317
        %2424 = vmatpush1.bf16.msra.mxu0 %v2316
        %2425 = vmatprep.subr.bf16.mxu0 %v2324
        %2426 = vmatpush1.bf16.msra.mxu0 %v2323
        %2427 = vmatprep.subr.bf16.mxu0 %v2331
        %2428 = vmatpush1.bf16.msra.mxu0 %v2330
        %2429 = vmatprep.subr.bf16.mxu0 %v2338
        %2430 = vmatpush1.bf16.msra.mxu0 %v2337
        %2431 = vmatprep.subr.bf16.mxu0 %v2345
        %2432 = vmatpush1.bf16.msra.mxu0 %v2344
        %2433 = vmatprep.subr.bf16.mxu0 %v2352
        %2434 = vmatpush1.bf16.msra.mxu0 %v2351
        %2435 = vmatprep.subr.bf16.mxu0 %v2359
        %2436 = vmatpush1.bf16.msra.mxu0 %v2358
        %2437 = vmatprep.subr.bf16.mxu0 0
        %2438 = vmatpush1.bf16.msra.mxu0 0
        %2439 = vmatprep.subr.bf16.mxu0 0
        %2440 = vmatpush1.bf16.msra.mxu0 0
        %2441 = vmatprep.subr.bf16.mxu0 0
        %2442 = vmatpush1.bf16.msra.mxu0 0
        %2443 = vmatprep.subr.bf16.mxu0 0
        %2444 = vmatpush1.bf16.msra.mxu0 0
        %2445 = vmatprep.subr.bf16.mxu0 0
        %2446 = vmatpush1.bf16.msra.mxu0 0
        %2447 = vmatprep.subr.bf16.mxu0 0
        %2448 = vmatpush1.bf16.msra.mxu0 0
        %2449 = vmatprep.subr.bf16.mxu0 0
        %2450 = vmatpush1.bf16.msra.mxu0 0
        %2451 = vmatprep.subr.bf16.mxu0 0
        %2452 = vmatpush1.bf16.msra.mxu0 0
        %2453 = vmatprep.mubr.bf16.mxu0 0
        %2454 = vmatmul.mubr.bf16.gmra.mrb[0].mxu0 %v2068
        %v2455 = vpop.f32.mrb[0].mxu0
        %v2456 = vadd.f32 0.0, %v2455
        %v2457 = vpop.f32.mrb[0].mxu0
        %v2458 = vadd.f32 0.0, %v2457
        %v2459 = vpop.f32.mrb[0].mxu0
        %v2460 = vpop.f32.mrb[0].mxu0
        %2461 = vdwg.mxu0
        %2462 = vmatprep.subr.bf16.mxu0 %v2312
        %2463 = vmatpush1.bf16.msra.mxu0 %v2311
        %2464 = vmatprep.subr.bf16.mxu0 %v2319
        %2465 = vmatpush1.bf16.msra.mxu0 %v2318
        %2466 = vmatprep.subr.bf16.mxu0 %v2326
        %2467 = vmatpush1.bf16.msra.mxu0 %v2325
        %2468 = vmatprep.subr.bf16.mxu0 %v2333
        %2469 = vmatpush1.bf16.msra.mxu0 %v2332
        %2470 = vmatprep.subr.bf16.mxu0 %v2340
        %2471 = vmatpush1.bf16.msra.mxu0 %v2339
        %2472 = vmatprep.subr.bf16.mxu0 %v2347
        %2473 = vmatpush1.bf16.msra.mxu0 %v2346
        %2474 = vmatprep.subr.bf16.mxu0 %v2354
        %2475 = vmatpush1.bf16.msra.mxu0 %v2353
        %2476 = vmatprep.subr.bf16.mxu0 %v2361
        %2477 = vmatpush1.bf16.msra.mxu0 %v2360
        %2478 = vmatprep.subr.bf16.mxu0 0
        %2479 = vmatpush1.bf16.msra.mxu0 0
        %2480 = vmatprep.subr.bf16.mxu0 0
        %2481 = vmatpush1.bf16.msra.mxu0 0
        %2482 = vmatprep.subr.bf16.mxu0 0
        %2483 = vmatpush1.bf16.msra.mxu0 0
        %2484 = vmatprep.subr.bf16.mxu0 0
        %2485 = vmatpush1.bf16.msra.mxu0 0
        %2486 = vmatprep.subr.bf16.mxu0 0
        %2487 = vmatpush1.bf16.msra.mxu0 0
        %2488 = vmatprep.subr.bf16.mxu0 0
        %2489 = vmatpush1.bf16.msra.mxu0 0
        %2490 = vmatprep.subr.bf16.mxu0 0
        %2491 = vmatpush1.bf16.msra.mxu0 0
        %2492 = vmatprep.subr.bf16.mxu0 0
        %2493 = vmatpush1.bf16.msra.mxu0 0
        %2494 = vmatprep.mubr.bf16.mxu0 0
        %2495 = vmatmul.mubr.bf16.gmra.mrb[0].mxu0 %v2068
        %v2496 = vpop.f32.mrb[0].mxu0
        %v2497 = vadd.f32 0.0, %v2496
        %v2498 = vpop.f32.mrb[0].mxu0
        %v2499 = vadd.f32 0.0, %v2498
        %v2500 = vpop.f32.mrb[0].mxu0
        %v2501 = vpop.f32.mrb[0].mxu0
        %2502 = vdwg.mxu0
        %2503 = vmatprep.subr.bf16.mxu0 %v2314
        %2504 = vmatpush1.bf16.msra.mxu0 %v2313
        %2505 = vmatprep.subr.bf16.mxu0 %v2321
        %2506 = vmatpush1.bf16.msra.mxu0 %v2320
        %2507 = vmatprep.subr.bf16.mxu0 %v2328
        %2508 = vmatpush1.bf16.msra.mxu0 %v2327
        %2509 = vmatprep.subr.bf16.mxu0 %v2335
        %2510 = vmatpush1.bf16.msra.mxu0 %v2334
        %2511 = vmatprep.subr.bf16.mxu0 %v2342
        %2512 = vmatpush1.bf16.msra.mxu0 %v2341
        %2513 = vmatprep.subr.bf16.mxu0 %v2349
        %2514 = vmatpush1.bf16.msra.mxu0 %v2348
        %2515 = vmatprep.subr.bf16.mxu0 %v2356
        %2516 = vmatpush1.bf16.msra.mxu0 %v2355
        %2517 = vmatprep.subr.bf16.mxu0 %v2363
        %2518 = vmatpush1.bf16.msra.mxu0 %v2362
        %2519 = vmatprep.subr.bf16.mxu0 0
        %2520 = vmatpush1.bf16.msra.mxu0 0
        %2521 = vmatprep.subr.bf16.mxu0 0
        %2522 = vmatpush1.bf16.msra.mxu0 0
        %2523 = vmatprep.subr.bf16.mxu0 0
        %2524 = vmatpush1.bf16.msra.mxu0 0
        %2525 = vmatprep.subr.bf16.mxu0 0
        %2526 = vmatpush1.bf16.msra.mxu0 0
        %2527 = vmatprep.subr.bf16.mxu0 0
        %2528 = vmatpush1.bf16.msra.mxu0 0
        %2529 = vmatprep.subr.bf16.mxu0 0
        %2530 = vmatpush1.bf16.msra.mxu0 0
        %2531 = vmatprep.subr.bf16.mxu0 0
        %2532 = vmatpush1.bf16.msra.mxu0 0
        %2533 = vmatprep.subr.bf16.mxu0 0
        %2534 = vmatpush1.bf16.msra.mxu0 0
        %2535 = vmatprep.mubr.bf16.mxu0 0
        %2536 = vmatmul.mubr.bf16.gmra.mrb[0].mxu0 %v2068
        %v2537 = vpop.f32.mrb[0].mxu0
        %v2538 = vadd.f32 0.0, %v2537
        %v2539 = vpop.f32.mrb[0].mxu0
        %v2540 = vadd.f32 0.0, %v2539
        %v2541 = vpop.f32.mrb[0].mxu0
        %v2542 = vpop.f32.mrb[0].mxu0
        %2543 = vdwg.mxu0
        %2544 = vmatprep.subr.bf16.mxu0 0
        %2545 = vmatpush1.bf16.msra.mxu0 %v2315
        %2546 = vmatprep.subr.bf16.mxu0 0
        %2547 = vmatpush1.bf16.msra.mxu0 %v2322
        %2548 = vmatprep.subr.bf16.mxu0 0
        %2549 = vmatpush1.bf16.msra.mxu0 %v2329
        %2550 = vmatprep.subr.bf16.mxu0 0
        %2551 = vmatpush1.bf16.msra.mxu0 %v2336
        %2552 = vmatprep.subr.bf16.mxu0 0
        %2553 = vmatpush1.bf16.msra.mxu0 %v2343
        %2554 = vmatprep.subr.bf16.mxu0 0
        %2555 = vmatpush1.bf16.msra.mxu0 %v2350
        %2556 = vmatprep.subr.bf16.mxu0 0
        %2557 = vmatpush1.bf16.msra.mxu0 %v2357
        %2558 = vmatprep.subr.bf16.mxu0 0
        %2559 = vmatpush1.bf16.msra.mxu0 %v2364
        %2560 = vmatprep.subr.bf16.mxu0 0
        %2561 = vmatpush1.bf16.msra.mxu0 0
        %2562 = vmatprep.subr.bf16.mxu0 0
        %2563 = vmatpush1.bf16.msra.mxu0 0
        %2564 = vmatprep.subr.bf16.mxu0 0
        %2565 = vmatpush1.bf16.msra.mxu0 0
        %2566 = vmatprep.subr.bf16.mxu0 0
        %2567 = vmatpush1.bf16.msra.mxu0 0
        %2568 = vmatprep.subr.bf16.mxu0 0
        %2569 = vmatpush1.bf16.msra.mxu0 0
        %2570 = vmatprep.subr.bf16.mxu0 0
        %2571 = vmatpush1.bf16.msra.mxu0 0
        %2572 = vmatprep.subr.bf16.mxu0 0
        %2573 = vmatpush1.bf16.msra.mxu0 0
        %2574 = vmatprep.subr.bf16.mxu0 0
        %2575 = vmatpush1.bf16.msra.mxu0 0
        %2576 = vmatprep.mubr.bf16.mxu0 0
        %2577 = vmatmul.mubr.bf16.gmra.mrb[0].mxu0 %v2068
        %v2578 = vpop.f32.mrb[0].mxu0
        %v2579 = vadd.f32 0.0, %v2578
        %v2580 = vpop.f32.mrb[0].mxu0
        %v2581 = vpop.f32.mrb[0].mxu0
        %v2582 = vpop.f32.mrb[0].mxu0
        %2583 = vdwg.mxu0
        %v2584 = vadd.f32 %v2061, %v2456
        %v2585 = vadd.f32 %v2062, %v2458
        %v2586 = vadd.f32 %v2063, %v2497
        %v2587 = vadd.f32 %v2064, %v2499
        %v2588 = vadd.f32 %v2065, %v2538
        %v2589 = vadd.f32 %v2066, %v2540
        %v2590 = vadd.f32 %v2067, %v2579
        %2591 = vst [vmem:[#allocation3] sm:$0xff] %v2584
        %2592 = vst [vmem:[#allocation3 + $0x8] sm:$0xff] %v2585
        %2593 = vst [vmem:[#allocation3 + $0x10] sm:$0xff] %v2586
        %2594 = vst [vmem:[#allocation3 + $0x18] sm:$0xff] %v2587
        %2595 = vst [vmem:[#allocation3 + $0x20] sm:$0xff] %v2588
        %2596 = vst [vmem:[#allocation3 + $0x28] sm:$0xff] %v2589
        %2597 = vst [vmem:[#allocation3 + $0x30] sm:$0xff] %v2590
        %p2598 = scmp.eq.s32.totalorder %s30, 4
        // Predicated region
        $region73: #{generator_forward.1} parent=43 // pred_check
          %p2599 = pneg %p2598
        $region74: #{generator_forward.1} parent=43 // pred_check_branch
          %2601 = sbr.rel (%p2599) target = $region76
        $region75: #{generator_forward.1} parent=43 // pred_region
          %v2602 = vld [vmem:[#allocation3] sm:$0xff]
          %v2603 = vld [vmem:[#allocation3 + $0x8] sm:$0xff]
          %v2604 = vld [vmem:[#allocation3 + $0x10] sm:$0xff]
          %v2605 = vld [vmem:[#allocation3 + $0x18] sm:$0xff]
          %v2606 = vld [vmem:[#allocation3 + $0x20] sm:$0xff]
          %v2607 = vld [vmem:[#allocation3 + $0x28] sm:$0xff]
          %v2608 = vld [vmem:[#allocation3 + $0x30] sm:$0xff]
          %2609 = vst [vmem:[%s419] sm:$0xff] %v2602
          %2610 = vst [vmem:[%s419 + $0x8] sm:$0xff] %v2603
          %2611 = vst [vmem:[%s419 + $0x10] sm:$0xff] %v2604
          %2612 = vst [vmem:[%s419 + $0x18] sm:$0xff] %v2605
          %2613 = vst [vmem:[%s419 + $0x20] sm:$0xff] %v2606
          %2614 = vst [vmem:[%s419 + $0x28] sm:$0xff] %v2607
          %2615 = vst [vmem:[%s419 + $0x30] sm:$0xff] %v2608
        $region76: #{generator_forward.1} parent=43 // pred_fallthru
          _
        %p2616 = scmp.lt.s32.totalorder %s29, 1
        %s2617 = scalar_select %p2616, %s29, 1
        %s2618 = smul.addr %s2617, 7
        %s2619 = smul.addr %s2618, 8
        %s2620 = scalar_lea.vmem %s6, %s2619
        // Predicated region
        $region77: #{generator_forward.1} parent=43 // pred_check
          %p2621 = pneg %p208
        $region78: #{generator_forward.1} parent=43 // pred_check_branch
          %2623 = sbr.rel (%p2621) target = $region80
        $region79: #{generator_forward.1} parent=43 // pred_region
          _
        $region80: #{generator_forward.1} parent=43 // pred_fallthru
          _
      $region44: #{generator_forward.1} parent=5 // pred_fallthru
        _
      %p2624 = scmp.le.s32.totalorder 2, %s20
      // Predicated region
      $region81: #{generator_forward.1} parent=5 // pred_check
        %p2625 = pneg %p2624
      $region82: #{generator_forward.1} parent=5 // pred_check_branch
        %2627 = sbr.rel (%p2625) target = $region84
      $region83: #{generator_forward.1} parent=5 // pred_region
        %s2628 = ssub.s32 %s20, 2
        // Predicated region
        $region85: #{generator_forward.1} parent=83 // pred_check
          %p2629 = pneg %p214
        $region86: #{generator_forward.1} parent=83 // pred_check_branch
          %2631 = sbr.rel (%p2629) target = $region88
        $region87: #{generator_forward.1} parent=83 // pred_region
          %p2632 = scmp.lt.s32.totalorder %s31, 1
          %s2633 = scalar_select %p2632, %s31, 1
          %s2634 = smul.addr %s2633, 7
          %s2635 = smul.addr %s2634, 8
          %s2636 = scalar_lea.vmem %s6, %s2635
        $region88: #{generator_forward.1} parent=83 // pred_fallthru
          _
      $region84: #{generator_forward.1} parent=5 // pred_fallthru
        _
    $region6: #{generator_forward.1} parent=1 // loop_footer
      %s24 = sadd.s32 1, %s20
    $region7: #{generator_forward.1} parent=1 // loop_footer_branch
      %19 = sbr.rel target = $region3
    $region8: #{generator_forward.1} parent=1 // loop_exit
      _
    %2637 = vsyncpa [#allocation5], 1
    %s2638 = scalar_lea.sflag [#allocation5], 1
    %2639 = vsyncpa %s2638, 1
    %2640 = vsyncpa [#allocation7], 1
    %2641 = vsyncpa [#allocation10], 1
    %s2642 = scalar_lea.sflag [#allocation10], 1
    %2643 = vsyncpa %s2642, 1
    %2644 = vsyncpa [#allocation13], 1
    %s2645 = scalar_lea.sflag [#allocation13], 1
    %2646 = vsyncpa %s2645, 1

</llo_original>
